<compile_context>
chip_gen: v7x
topology: tpu7x:2x2x1
jax: 0.10.0
libtpu: 0.0.40
codegen_flags: <defaults>
</compile_context>

<pallas_src>
import functools

import jax
import jax.numpy as jnp
from jax import lax
from jax.experimental import pallas as pl
from jax.experimental.pallas import tpu as pltpu

EPS = 1e-5
LANE = 128
MATMUL_DTYPE = jnp.bfloat16


def _round_up(x, m):
    return (x + m - 1) // m * m


@functools.lru_cache(maxsize=None)
def _vmem_limit():
    """Generation-aware scoped-VMEM budget."""
    cap = 64 * 1024 * 1024
    try:
        cap = int(pltpu.get_tpu_info().vmem_capacity_bytes)
    except Exception:
        pass
    # ~75% of physical, capped, floor at 16 MiB.
    return max(16 * 1024 * 1024, min((cap * 3) // 4, 100 * 1024 * 1024))


def _pick_row_tile(m, bytes_per_row, budget):
    """Largest divisor of m whose double-buffered row-tile footprint fits."""
    best = 1
    for t in range(1, m + 1):
        if m % t == 0 and 2 * t * bytes_per_row <= budget:
            best = t
    return best


# --------------------------------------------------------------------------
# Kernel 1: 3x3/stride conv (+ fused 1x1 projection shortcut) as ONE folded
# MXU matmul on the striped stride-phase layout, fused with BN batch stats.
# --------------------------------------------------------------------------
def _conv1_kernel(*refs, stride, ho, wf, cout_p, with_shortcut):
    if with_shortcut:
        (x_ref, w_ref, valid_ref,
         y_ref, s_ref, q_ref, ys_ref, ss_ref, qs_ref) = refs
    else:
        x_ref, w_ref, valid_ref, y_ref, s_ref, q_ref = refs

    lv = ho * wf
    hph = ho + (2 // stride) + 1          # rows per stride-phase sub-image
    valid = valid_ref[...]                # (lv, 1) f32 stripe-column mask

    # Fold the 9 taps into the contraction dim: one (lv, 9*cin) @ (9*cin, N)
    # matmul instead of 9 K-starved matmuls (N = 2*cout_p when the projection
    # shortcut is fused in as extra output columns).
    taps = []
    for kh in range(3):
        for kw in range(3):
            p = (kh % stride) * stride + (kw % stride)
            base = p * hph * wf + (kh // stride) * wf + (kw // stride)
            taps.append(x_ref[0, base:base + lv, :])          # (lv, cin) bf16
    lhs = jnp.concatenate(taps, axis=-1)                      # (lv, 9*cin)
    acc_all = jnp.dot(lhs, w_ref[...], preferred_element_type=jnp.float32)

    acc = acc_all[:, :cout_p]
    y_ref[0] = acc.astype(y_ref.dtype)
    s_ref[0] = jnp.sum(acc * valid, axis=0, keepdims=True)
    q_ref[0] = jnp.sum(acc * acc * valid, axis=0, keepdims=True)

    if with_shortcut:
        # 1x1/stride projection == center tap (kh=kw=1) of the padded 3x3 grid;
        # its weights live in columns [cout_p : 2*cout_p) of the same matmul.
        acc_s = acc_all[:, cout_p:]
        ys_ref[...] = acc_s.reshape(ys_ref.shape).astype(ys_ref.dtype)
        ss_ref[0] = jnp.sum(acc_s * valid, axis=0, keepdims=True)
        qs_ref[0] = jnp.sum(acc_s * acc_s * valid, axis=0, keepdims=True)


def _conv1_call(xph, w, valid, *, stride, ho, wf, cout_p, n, with_shortcut):
    lv = ho * wf
    lx = xph.shape[1]
    cin = xph.shape[2]
    kernel = functools.partial(_conv1_kernel, stride=stride, ho=ho, wf=wf,
                               cout_p=cout_p, with_shortcut=with_shortcut)

    x_spec = pl.BlockSpec((1, lx, cin), lambda i: (i, 0, 0))
    w_spec = pl.BlockSpec(w.shape, lambda i: (0, 0))          # resident weights
    v_spec = pl.BlockSpec((lv, 1), lambda i: (0, 0))          # resident mask
    y_spec = pl.BlockSpec((1, lv, cout_p), lambda i: (i, 0, 0))
    st_spec = pl.BlockSpec((1, 1, cout_p), lambda i: (i, 0, 0))

    y_shape = jax.ShapeDtypeStruct((n, lv, cout_p), MATMUL_DTYPE)
    st_shape = jax.ShapeDtypeStruct((n, 1, cout_p), jnp.float32)

    if with_shortcut:
        ys_spec = pl.BlockSpec((ho, wf, cout_p), lambda i: (i, 0, 0))
        ys_shape = jax.ShapeDtypeStruct((n * ho, wf, cout_p), MATMUL_DTYPE)
        out_shape = (y_shape, st_shape, st_shape, ys_shape, st_shape, st_shape)
        out_specs = (y_spec, st_spec, st_spec, ys_spec, st_spec, st_spec)
    else:
        out_shape = (y_shape, st_shape, st_shape)
        out_specs = (y_spec, st_spec, st_spec)

    return pl.pallas_call(
        kernel,
        grid=(n,),
        out_shape=out_shape,
        in_specs=[x_spec, w_spec, v_spec],
        out_specs=out_specs,
        compiler_params=pltpu.CompilerParams(
            dimension_semantics=("parallel",),
            vmem_limit_bytes=_vmem_limit()),
    )(xph, w, valid)


# --------------------------------------------------------------------------
# Kernel 2: fused BN1-affine + ReLU + 3x3/1 conv (9 shifted MXU matmuls) +
# BN2 batch stats.  The activated conv1 output lands in a VMEM scratch whose
# zeroed margin rows / stripe columns provide conv2's spatial zero padding,
# so there is no HBM-side BN/ReLU pass and no XLA pad copy.
# --------------------------------------------------------------------------
def _conv2_kernel(y1_ref, w_ref, sc_ref, sh_ref, valid_ref,
                  y2_ref, s_ref, q_ref, pad_ref, *, ho, wf, cout_p):
    lv = ho * wf
    front = wf + 1
    back = 2 * wf - 1
    valid = valid_ref[...]                                    # (lv, 1)

    act = y1_ref[0].astype(jnp.float32) * sc_ref[...] + sh_ref[...]
    act = jnp.maximum(act, 0.0) * valid        # BN1 + ReLU, stripe cols -> 0
    pad_ref[0:front, :] = jnp.zeros((front, cout_p), pad_ref.dtype)
    pad_ref[front:front + lv, :] = act.astype(pad_ref.dtype)
    pad_ref[front + lv:front + lv + back, :] = jnp.zeros((back, cout_p),
                                                         pad_ref.dtype)

    acc = jnp.zeros((lv, cout_p), jnp.float32)
    for k in range(9):
        base = (k // 3) * wf + (k % 3)
        acc = acc + jnp.dot(pad_ref[base:base + lv, :],
                            w_ref[k * cout_p:(k + 1) * cout_p, :],
                            preferred_element_type=jnp.float32)

    y2_ref[...] = acc.reshape(y2_ref.shape).astype(y2_ref.dtype)
    s_ref[0] = jnp.sum(acc * valid, axis=0, keepdims=True)
    q_ref[0] = jnp.sum(acc * acc * valid, axis=0, keepdims=True)


def _conv2_call(y1, w2, scale1, shift1, valid, *, ho, wf, cout_p, n):
    lv = ho * wf
    l2 = (ho + 3) * wf
    kernel = functools.partial(_conv2_kernel, ho=ho, wf=wf, cout_p=cout_p)
    return pl.pallas_call(
        kernel,
        grid=(n,),
        out_shape=(jax.ShapeDtypeStruct((n * ho, wf, cout_p), MATMUL_DTYPE),
                   jax.ShapeDtypeStruct((n, 1, cout_p), jnp.float32),
                   jax.ShapeDtypeStruct((n, 1, cout_p), jnp.float32)),
        in_specs=[pl.BlockSpec((1, lv, cout_p), lambda i: (i, 0, 0)),
                  pl.BlockSpec((9 * cout_p, cout_p), lambda i: (0, 0)),
                  pl.BlockSpec((1, cout_p), lambda i: (0, 0)),
                  pl.BlockSpec((1, cout_p), lambda i: (0, 0)),
                  pl.BlockSpec((lv, 1), lambda i: (0, 0))],
        out_specs=(pl.BlockSpec((ho, wf, cout_p), lambda i: (i, 0, 0)),
                   pl.BlockSpec((1, 1, cout_p), lambda i: (i, 0, 0)),
                   pl.BlockSpec((1, 1, cout_p), lambda i: (i, 0, 0))),
        scratch_shapes=[pltpu.VMEM((l2, cout_p), MATMUL_DTYPE)],
        compiler_params=pltpu.CompilerParams(
            dimension_semantics=("parallel",),
            vmem_limit_bytes=_vmem_limit()),
    )(y1, w2, scale1, shift1, valid)


# --------------------------------------------------------------------------
# Kernel 3: BN2 affine + shortcut BN affine + residual add + ReLU.
# Row-tiled; only the wo valid columns are computed and written.
# --------------------------------------------------------------------------
def _final_kernel(y2_ref, res_ref, sc2_ref, sh2_ref, scs_ref, shs_ref,
                  o_ref, *, wo):
    y = y2_ref[:, :wo, :].astype(jnp.float32)
    r = res_ref[:, :wo, :].astype(jnp.float32)
    out = y * sc2_ref[...] + sh2_ref[...] + r * scs_ref[...] + shs_ref[...]
    o_ref[...] = jnp.maximum(out, 0.0).astype(o_ref.dtype)


def _final_call(y2, res, scale2, shift2, scale_s, shift_s, *, wo, wf, cout_p):
    m = y2.shape[0]
    bytes_per_row = 2 * (wf * cout_p * 2) + wo * cout_p * 4   # 2 bf16 in + f32 out
    tr = _pick_row_tile(m, bytes_per_row, _vmem_limit() // 3)
    kernel = functools.partial(_final_kernel, wo=wo)
    in_spec = pl.BlockSpec((tr, wf, cout_p), lambda i: (i, 0, 0))
    out_spec = pl.BlockSpec((tr, wo, cout_p), lambda i: (i, 0, 0))
    vec_spec = pl.BlockSpec((1, cout_p), lambda i: (0, 0))
    return pl.pallas_call(
        kernel,
        grid=(m // tr,),
        out_shape=jax.ShapeDtypeStruct((m, wo, cout_p), jnp.float32),
        in_specs=[in_spec, in_spec, vec_spec, vec_spec, vec_spec, vec_spec],
        out_specs=out_spec,
        compiler_params=pltpu.CompilerParams(
            dimension_semantics=("parallel",),
            vmem_limit_bytes=_vmem_limit()),
    )(y2, res, scale2, shift2, scale_s, shift_s)


def _bn_affine(s_part, q_part, gamma, beta, count, c_pad):
    s = jnp.sum(s_part, axis=0)        # (1, c_pad)
    q = jnp.sum(q_part, axis=0)
    mean = s / count
    # TODO(synk): E[y^2]-E[y]^2 can cancel for large activations; use Welford /
    # mean-shifted accumulation at scale.
    var = jnp.maximum(q / count - mean * mean, 0.0)
    g = jnp.pad(gamma, (0, c_pad - gamma.shape[0])).reshape(1, c_pad)
    bt = jnp.pad(beta, (0, c_pad - beta.shape[0])).reshape(1, c_pad)
    scale = g * lax.rsqrt(var + EPS)
    shift = bt - mean * scale
    return scale, shift


# --------------------------------------------------------------------------
# ResBlk forward (wrapper is layout plumbing only; hot loops are in Pallas).
# --------------------------------------------------------------------------
def resblk_forward(x_nchw, params, stride):
    assert stride in (1, 2), "stride-phase tap mapping validated for stride in {1,2}"
    x = jnp.transpose(x_nchw, (0, 2, 3, 1)).astype(jnp.float32)   # NCHW -> NHWC
    n, h, w, cin = x.shape
    cout = params["w1"].shape[0]
    ho = (h + 2 - 3) // stride + 1
    wo = (w + 2 - 3) // stride + 1
    wf = wo + 2                       # striped row width (2 cols double as pad)
    cout_p = _round_up(cout, LANE)
    lv = ho * wf
    mv = n * ho * wo                  # valid pixels per channel for BN stats

    has_proj = (cin != cout)
    if not has_proj:
        assert stride == 1, "identity shortcut requires stride == 1"

    # ---- stride-phase decomposition of the spatially padded input (true cin
    # channels: no HBM cin->128 pad pass, taps folded in-kernel). -------------
    xp = jnp.pad(x, ((0, 0), (1, 1), (1, 1), (0, 0)))
    hph = ho + (2 // stride) + 1
    phases = []
    for ph in range(stride):
        for pw in range(stride):
            sub = xp[:, ph::stride, pw::stride, :][:, :hph, :wf, :]
            sub = jnp.pad(sub, ((0, 0), (0, hph - sub.shape[1]),
                                (0, wf - sub.shape[2]), (0, 0)))
            phases.append(sub)
    xph = jnp.stack(phases, axis=1).reshape(
        n, stride * stride * hph * wf, cin).astype(MATMUL_DTYPE)

    # ---- weights.  Conv biases (b1/b2/bs) are dropped: bias feeding BN is a
    # mathematical no-op (mean absorbs it, variance unchanged). ---------------
    w1m = jnp.transpose(params["w1"], (2, 3, 1, 0)).reshape(9 * cin, cout)
    w1m = jnp.pad(w1m, ((0, 0), (0, cout_p - cout)))
    if has_proj:
        wsm = params["ws"].reshape(cout, cin).T                      # (cin, cout)
        ws_embed = jnp.zeros((9 * cin, cout), jnp.float32)
        ws_embed = ws_embed.at[4 * cin:5 * cin, :].set(wsm)          # center tap
        ws_embed = jnp.pad(ws_embed, ((0, 0), (0, cout_p - cout)))
        wa = jnp.concatenate([w1m, ws_embed], axis=1)                # (9cin, 2*cout_p)
    else:
        wa = w1m
    wa = wa.astype(MATMUL_DTYPE)

    w2m = jnp.transpose(params["w2"], (2, 3, 1, 0))
    w2m = jnp.pad(w2m, ((0, 0), (0, 0), (0, cout_p - cout), (0, cout_p - cout)))
    w2m = w2m.reshape(9 * cout_p, cout_p).astype(MATMUL_DTYPE)

    # Precomputed stripe-column validity mask (resident (lv, 1) operand).
    valid = ((jnp.arange(lv) % wf) < wo).astype(jnp.float32)[:, None]

    # ---- conv1 (3x3, stride) [+ fused 1x1 projection shortcut] -------------
    res1 = _conv1_call(xph, wa, valid, stride=stride, ho=ho, wf=wf,
                       cout_p=cout_p, n=n, with_shortcut=has_proj)
    if has_proj:
        y1, s1, q1, ysc, ssc, qsc = res1
    else:
        y1, s1, q1 = res1
    scale1, shift1 = _bn_affine(s1, q1, params["g1"], params["be1"], mv, cout_p)

    # ---- fused BN1+ReLU + conv2 (3x3, stride 1) -----------------------------
    y2, s2, q2 = _conv2_call(y1, w2m, scale1, shift1, valid,
                             ho=ho, wf=wf, cout_p=cout_p, n=n)
    scale2, shift2 = _bn_affine(s2, q2, params["g2"], params["be2"], mv, cout_p)

    # ---- shortcut BN affine, fused into the final elementwise kernel --------
    if has_proj:
        scale_s, shift_s = _bn_affine(ssc, qsc, params["gs"], params["bes"],
                                      mv, cout_p)
        res = ysc
    else:
        res = jnp.pad(x, ((0, 0), (0, 0), (0, wf - w), (0, cout_p - cin)))
        res = res.reshape(n * ho, wf, cout_p).astype(MATMUL_DTYPE)
        scale_s = jnp.ones((1, cout_p), jnp.float32)
        shift_s = jnp.zeros((1, cout_p), jnp.float32)

    out = _final_call(y2, res, scale2, shift2, scale_s, shift_s,
                      wo=wo, wf=wf, cout_p=cout_p)
    out = out.reshape(n, ho, wo, cout_p)[:, :, :, :cout]
    return jnp.transpose(out, (0, 3, 1, 2))                          # -> NCHW


# --------------------------------------------------------------------------
# Pure-JAX f32 reference (keeps the conv biases, which BN provably absorbs).
# --------------------------------------------------------------------------
def _conv_ref(x, w, b, stride, pad):
    y = lax.conv_general_dilated(
        x, w, (stride, stride), [(pad, pad), (pad, pad)],
        dimension_numbers=("NCHW", "OIHW", "NCHW"))
    return y + b.reshape(1, -1, 1, 1)


def _bn_ref(y, gamma, beta):
    mean = y.mean(axis=(0, 2, 3), keepdims=True)
    var = y.var(axis=(0, 2, 3), keepdims=True)
    xh = (y - mean) * lax.rsqrt(var + EPS)
    return xh * gamma.reshape(1, -1, 1, 1) + beta.reshape(1, -1, 1, 1)


def resblk_ref(x, p, stride):
    out = jax.nn.relu(_bn_ref(_conv_ref(x, p["w1"], p["b1"], stride, 1),
                              p["g1"], p["be1"]))
    out = _bn_ref(_conv_ref(out, p["w2"], p["b2"], 1, 1), p["g2"], p["be2"])
    if "ws" in p:
        sc = _bn_ref(_conv_ref(x, p["ws"], p["bs"], stride, 0),
                     p["gs"], p["bes"])
    else:
        sc = x
    return jax.nn.relu(sc + out)


def _make_params(key, cin, cout, with_proj):
    keys = jax.random.split(key, 16)

    def nrm(k, shape, s=0.1):
        return s * jax.random.normal(k, shape, jnp.float32)

    p = {
        "w1": nrm(keys[1], (cout, cin, 3, 3)),
        "b1": nrm(keys[2], (cout,)),
        "g1": 1.0 + nrm(keys[3], (cout,)),
        "be1": nrm(keys[4], (cout,)),
        "w2": nrm(keys[5], (cout, cout, 3, 3)),
        "b2": nrm(keys[6], (cout,)),
        "g2": 1.0 + nrm(keys[7], (cout,)),
        "be2": nrm(keys[8], (cout,)),
    }
    if with_proj:
        p.update({
            "ws": nrm(keys[9], (cout, cin, 1, 1)),
            "bs": nrm(keys[10], (cout,)),
            "gs": 1.0 + nrm(keys[11], (cout,)),
            "bes": nrm(keys[12], (cout,)),
        })
    return p


if __name__ == "__main__":
    key = jax.random.PRNGKey(0)
    k_x1, k_p1, k_x2, k_p2 = jax.random.split(key, 4)

    # Case 1: projection shortcut (ch_in != ch_out), stride 2.
    N, CIN, H, W, COUT, STRIDE = 2, 4, 16, 16, 8, 2
    x1 = jax.random.normal(k_x1, (N, CIN, H, W), jnp.float32)
    p1 = _make_params(k_p1, CIN, COUT, with_proj=True)
    out1 = jax.block_until_ready(resblk_forward(x1, p1, STRIDE))
    ref1 = jax.block_until_ready(resblk_ref(x1, p1, STRIDE))
    assert out1.shape == (N, COUT, H // STRIDE, W // STRIDE), out1.shape
    # bf16 MXU operands and bf16-stored intermediates (f32 accumulation) =>
    # relaxed tolerance vs the all-f32 reference.
    assert jnp.allclose(out1, ref1, rtol=3e-2, atol=3e-2), \
        float(jnp.max(jnp.abs(out1 - ref1)))

    # Case 2: identity shortcut (ch_in == ch_out), stride 1.
    C2 = 8
    x2 = jax.random.normal(k_x2, (N, C2, H, W), jnp.float32)
    p2 = _make_params(k_p2, C2, C2, with_proj=False)
    out2 = jax.block_until_ready(resblk_forward(x2, p2, 1))
    ref2 = jax.block_until_ready(resblk_ref(x2, p2, 1))
    assert out2.shape == (N, C2, H, W), out2.shape
    assert jnp.allclose(out2, ref2, rtol=3e-2, atol=3e-2), \
        float(jnp.max(jnp.abs(out2 - ref2)))

    print("KERNEL_OK")
</pallas_src>

<mosaic_0001>
module attributes {stable_mosaic.version = 11 : i64} {
  func.func @_conv1_kernel(%arg0: i32, %arg1: memref<1x400x4xbf16, #tpu.memory_space<vmem>>, %arg2: memref<36x256xbf16, #tpu.memory_space<vmem>>, %arg3: memref<80x1xf32, #tpu.memory_space<vmem>>, %arg4: memref<1x80x128xbf16, #tpu.memory_space<vmem>>, %arg5: memref<1x1x128xf32, #tpu.memory_space<vmem>>, %arg6: memref<1x1x128xf32, #tpu.memory_space<vmem>>, %arg7: memref<8x10x128xbf16, #tpu.memory_space<vmem>>, %arg8: memref<1x1x128xf32, #tpu.memory_space<vmem>>, %arg9: memref<1x1x128xf32, #tpu.memory_space<vmem>>) attributes {dimension_semantics = [#tpu.dimension_semantics<parallel>], iteration_bounds = array<i64: 2>, scalar_prefetch = 0 : i64, scratch_operands = 0 : i64, tpu.core_type = #tpu.core_type<tc>, window_params = [{transform_indices = @transform_0, window_bounds = array<i64: 1, 400, 4>}, {pipeline_mode = #tpu.pipeline_mode<synchronous>, transform_indices = @transform_1, window_bounds = array<i64: 36, 256>}, {pipeline_mode = #tpu.pipeline_mode<synchronous>, transform_indices = @transform_2, window_bounds = array<i64: 80, 1>}, {transform_indices = @transform_3, window_bounds = array<i64: 1, 80, 128>}, {transform_indices = @transform_4, window_bounds = array<i64: 1, 1, 128>}, {transform_indices = @transform_5, window_bounds = array<i64: 1, 1, 128>}, {transform_indices = @transform_6, window_bounds = array<i64: 8, 10, 128>}, {transform_indices = @transform_7, window_bounds = array<i64: 1, 1, 128>}, {transform_indices = @transform_8, window_bounds = array<i64: 1, 1, 128>}]} {
    %c0 = arith.constant 0 : index
    %c0_0 = arith.constant 0 : index
    %0 = vector.load %arg3[%c0, %c0_0] : memref<80x1xf32, #tpu.memory_space<vmem>>, vector<80x1xf32>
    %c0_1 = arith.constant 0 : index
    %c0_2 = arith.constant 0 : index
    %c0_3 = arith.constant 0 : index
    %1 = vector.load %arg1[%c0_1, %c0_2, %c0_3] : memref<1x400x4xbf16, #tpu.memory_space<vmem>>, vector<1x80x4xbf16>
    %2 = vector.shape_cast %1 : vector<1x80x4xbf16> to vector<80x4xbf16>
    %c0_4 = arith.constant 0 : index
    %c100 = arith.constant 100 : index
    %c0_5 = arith.constant 0 : index
    %3 = vector.load %arg1[%c0_4, %c100, %c0_5] : memref<1x400x4xbf16, #tpu.memory_space<vmem>>, vector<1x80x4xbf16>
    %4 = vector.shape_cast %3 : vector<1x80x4xbf16> to vector<80x4xbf16>
    %c0_6 = arith.constant 0 : index
    %c1 = arith.constant 1 : index
    %c0_7 = arith.constant 0 : index
    %5 = vector.load %arg1[%c0_6, %c1, %c0_7] : memref<1x400x4xbf16, #tpu.memory_space<vmem>>, vector<1x80x4xbf16>
    %6 = vector.shape_cast %5 : vector<1x80x4xbf16> to vector<80x4xbf16>
    %c0_8 = arith.constant 0 : index
    %c200 = arith.constant 200 : index
    %c0_9 = arith.constant 0 : index
    %7 = vector.load %arg1[%c0_8, %c200, %c0_9] : memref<1x400x4xbf16, #tpu.memory_space<vmem>>, vector<1x80x4xbf16>
    %8 = vector.shape_cast %7 : vector<1x80x4xbf16> to vector<80x4xbf16>
    %c0_10 = arith.constant 0 : index
    %c300 = arith.constant 300 : index
    %c0_11 = arith.constant 0 : index
    %9 = vector.load %arg1[%c0_10, %c300, %c0_11] : memref<1x400x4xbf16, #tpu.memory_space<vmem>>, vector<1x80x4xbf16>
    %10 = vector.shape_cast %9 : vector<1x80x4xbf16> to vector<80x4xbf16>
    %c0_12 = arith.constant 0 : index
    %c201 = arith.constant 201 : index
    %c0_13 = arith.constant 0 : index
    %11 = vector.load %arg1[%c0_12, %c201, %c0_13] : memref<1x400x4xbf16, #tpu.memory_space<vmem>>, vector<1x80x4xbf16>
    %12 = vector.shape_cast %11 : vector<1x80x4xbf16> to vector<80x4xbf16>
    %c0_14 = arith.constant 0 : index
    %c10 = arith.constant 10 : index
    %c0_15 = arith.constant 0 : index
    %13 = vector.load %arg1[%c0_14, %c10, %c0_15] : memref<1x400x4xbf16, #tpu.memory_space<vmem>>, vector<1x80x4xbf16>
    %14 = vector.shape_cast %13 : vector<1x80x4xbf16> to vector<80x4xbf16>
    %c0_16 = arith.constant 0 : index
    %c110 = arith.constant 110 : index
    %c0_17 = arith.constant 0 : index
    %15 = vector.load %arg1[%c0_16, %c110, %c0_17] : memref<1x400x4xbf16, #tpu.memory_space<vmem>>, vector<1x80x4xbf16>
    %16 = vector.shape_cast %15 : vector<1x80x4xbf16> to vector<80x4xbf16>
    %c0_18 = arith.constant 0 : index
    %c11 = arith.constant 11 : index
    %c0_19 = arith.constant 0 : index
    %17 = vector.load %arg1[%c0_18, %c11, %c0_19] : memref<1x400x4xbf16, #tpu.memory_space<vmem>>, vector<1x80x4xbf16>
    %18 = vector.shape_cast %17 : vector<1x80x4xbf16> to vector<80x4xbf16>
    %19 = tpu.concatenate %2, %4, %6, %8, %10, %12, %14, %16, %18 in 1 : vector<80x4xbf16>, vector<80x4xbf16>, vector<80x4xbf16>, vector<80x4xbf16>, vector<80x4xbf16>, vector<80x4xbf16>, vector<80x4xbf16>, vector<80x4xbf16>, vector<80x4xbf16> -> vector<80x36xbf16>
    %c0_20 = arith.constant 0 : index
    %c0_21 = arith.constant 0 : index
    %20 = vector.load %arg2[%c0_20, %c0_21] : memref<36x256xbf16, #tpu.memory_space<vmem>>, vector<36x256xbf16>
    %cst = arith.constant dense<0.000000e+00> : vector<80x256xf32>
    %21 = tpu.matmul %19, %20, %cst {dimension_numbers = #tpu.dot_dimension_numbers<[1], [0], [0], [1], [0, 0, 1, 1], [], []>} : vector<80x36xbf16>, vector<36x256xbf16>, vector<80x256xf32> -> vector<80x256xf32>
    %22 = vector.extract_strided_slice %21 {offsets = [0, 0], sizes = [80, 128], strides = [1, 1]} : vector<80x256xf32> to vector<80x128xf32>
    %23 = arith.truncf %22 : vector<80x128xf32> to vector<80x128xbf16>
    %c0_22 = arith.constant 0 : index
    %c0_23 = arith.constant 0 : index
    %c0_24 = arith.constant 0 : index
    %24 = vector.load %arg4[%c0_22, %c0_23, %c0_24] : memref<1x80x128xbf16, #tpu.memory_space<vmem>>, vector<1x80x128xbf16>
    %25 = vector.shape_cast %24 : vector<1x80x128xbf16> to vector<80x128xbf16>
    %26 = vector.shape_cast %23 : vector<80x128xbf16> to vector<1x80x128xbf16>
    tpu.vector_store %arg4[%c0_22, %c0_23, %c0_24], %26 {strides = array<i32>} : memref<1x80x128xbf16, #tpu.memory_space<vmem>>, vector<1x80x128xbf16>,
    %27 = vector.broadcast %0 : vector<80x1xf32> to vector<80x128xf32>
    %28 = arith.mulf %22, %27 : vector<80x128xf32>
    %cst_25 = arith.constant dense<0.000000e+00> : vector<128xf32>
    %29 = vector.multi_reduction <add>, %28, %cst_25 [0] : vector<80x128xf32> to vector<128xf32>
    %30 = vector.shape_cast %29 : vector<128xf32> to vector<1x128xf32>
    %c0_26 = arith.constant 0 : index
    %c0_27 = arith.constant 0 : index
    %c0_28 = arith.constant 0 : index
    %31 = vector.load %arg5[%c0_26, %c0_27, %c0_28] : memref<1x1x128xf32, #tpu.memory_space<vmem>>, vector<1x1x128xf32>
    %32 = vector.shape_cast %31 : vector<1x1x128xf32> to vector<1x128xf32>
    %33 = vector.shape_cast %30 : vector<1x128xf32> to vector<1x1x128xf32>
    tpu.vector_store %arg5[%c0_26, %c0_27, %c0_28], %33 {strides = array<i32>} : memref<1x1x128xf32, #tpu.memory_space<vmem>>, vector<1x1x128xf32>,
    %34 = arith.mulf %22, %22 : vector<80x128xf32>
    %35 = vector.broadcast %0 : vector<80x1xf32> to vector<80x128xf32>
    %36 = arith.mulf %34, %35 : vector<80x128xf32>
    %cst_29 = arith.constant dense<0.000000e+00> : vector<128xf32>
    %37 = vector.multi_reduction <add>, %36, %cst_29 [0] : vector<80x128xf32> to vector<128xf32>
    %38 = vector.shape_cast %37 : vector<128xf32> to vector<1x128xf32>
    %c0_30 = arith.constant 0 : index
    %c0_31 = arith.constant 0 : index
    %c0_32 = arith.constant 0 : index
    %39 = vector.load %arg6[%c0_30, %c0_31, %c0_32] : memref<1x1x128xf32, #tpu.memory_space<vmem>>, vector<1x1x128xf32>
    %40 = vector.shape_cast %39 : vector<1x1x128xf32> to vector<1x128xf32>
    %41 = vector.shape_cast %38 : vector<1x128xf32> to vector<1x1x128xf32>
    tpu.vector_store %arg6[%c0_30, %c0_31, %c0_32], %41 {strides = array<i32>} : memref<1x1x128xf32, #tpu.memory_space<vmem>>, vector<1x1x128xf32>,
    %42 = vector.extract_strided_slice %21 {offsets = [0, 128], sizes = [80, 128], strides = [1, 1]} : vector<80x256xf32> to vector<80x128xf32>
    %43 = vector.shape_cast %42 : vector<80x128xf32> to vector<8x10x128xf32>
    %44 = arith.truncf %43 : vector<8x10x128xf32> to vector<8x10x128xbf16>
    %c0_33 = arith.constant 0 : index
    %c0_34 = arith.constant 0 : index
    %c0_35 = arith.constant 0 : index
    %45 = vector.load %arg7[%c0_33, %c0_34, %c0_35] : memref<8x10x128xbf16, #tpu.memory_space<vmem>>, vector<8x10x128xbf16>
    tpu.vector_store %arg7[%c0_33, %c0_34, %c0_35], %44 {strides = array<i32>} : memref<8x10x128xbf16, #tpu.memory_space<vmem>>, vector<8x10x128xbf16>,
    %46 = vector.broadcast %0 : vector<80x1xf32> to vector<80x128xf32>
    %47 = arith.mulf %42, %46 : vector<80x128xf32>
    %cst_36 = arith.constant dense<0.000000e+00> : vector<128xf32>
    %48 = vector.multi_reduction <add>, %47, %cst_36 [0] : vector<80x128xf32> to vector<128xf32>
    %49 = vector.shape_cast %48 : vector<128xf32> to vector<1x128xf32>
    %c0_37 = arith.constant 0 : index
    %c0_38 = arith.constant 0 : index
    %c0_39 = arith.constant 0 : index
    %50 = vector.load %arg8[%c0_37, %c0_38, %c0_39] : memref<1x1x128xf32, #tpu.memory_space<vmem>>, vector<1x1x128xf32>
    %51 = vector.shape_cast %50 : vector<1x1x128xf32> to vector<1x128xf32>
    %52 = vector.shape_cast %49 : vector<1x128xf32> to vector<1x1x128xf32>
    tpu.vector_store %arg8[%c0_37, %c0_38, %c0_39], %52 {strides = array<i32>} : memref<1x1x128xf32, #tpu.memory_space<vmem>>, vector<1x1x128xf32>,
    %53 = arith.mulf %42, %42 : vector<80x128xf32>
    %54 = vector.broadcast %0 : vector<80x1xf32> to vector<80x128xf32>
    %55 = arith.mulf %53, %54 : vector<80x128xf32>
    %cst_40 = arith.constant dense<0.000000e+00> : vector<128xf32>
    %56 = vector.multi_reduction <add>, %55, %cst_40 [0] : vector<80x128xf32> to vector<128xf32>
    %57 = vector.shape_cast %56 : vector<128xf32> to vector<1x128xf32>
    %c0_41 = arith.constant 0 : index
    %c0_42 = arith.constant 0 : index
    %c0_43 = arith.constant 0 : index
    %58 = vector.load %arg9[%c0_41, %c0_42, %c0_43] : memref<1x1x128xf32, #tpu.memory_space<vmem>>, vector<1x1x128xf32>
    %59 = vector.shape_cast %58 : vector<1x1x128xf32> to vector<1x128xf32>
    %60 = vector.shape_cast %57 : vector<1x128xf32> to vector<1x1x128xf32>
    tpu.vector_store %arg9[%c0_41, %c0_42, %c0_43], %60 {strides = array<i32>} : memref<1x1x128xf32, #tpu.memory_space<vmem>>, vector<1x1x128xf32>,
    return
  }
  func.func @transform_0(%arg0: i32) -> (i32, i32, i32) {
    %c0_i32 = arith.constant 0 : i32
    %c0_i32_0 = arith.constant 0 : i32
    %c0_i32_1 = arith.constant 0 : i32
    return %arg0, %c0_i32, %c0_i32_0 : i32, i32, i32
  }
  func.func @transform_1(%arg0: i32) -> (i32, i32) {
    %c0_i32 = arith.constant 0 : i32
    %c0_i32_0 = arith.constant 0 : i32
    %c0_i32_1 = arith.constant 0 : i32
    return %c0_i32, %c0_i32_0 : i32, i32
  }
  func.func @transform_2(%arg0: i32) -> (i32, i32) {
    %c0_i32 = arith.constant 0 : i32
    %c0_i32_0 = arith.constant 0 : i32
    %c0_i32_1 = arith.constant 0 : i32
    return %c0_i32, %c0_i32_0 : i32, i32
  }
  func.func @transform_3(%arg0: i32) -> (i32, i32, i32) {
    %c0_i32 = arith.constant 0 : i32
    %c0_i32_0 = arith.constant 0 : i32
    %c0_i32_1 = arith.constant 0 : i32
    return %arg0, %c0_i32, %c0_i32_0 : i32, i32, i32
  }
  func.func @transform_4(%arg0: i32) -> (i32, i32, i32) {
    %c0_i32 = arith.constant 0 : i32
    %c0_i32_0 = arith.constant 0 : i32
    %c0_i32_1 = arith.constant 0 : i32
    return %arg0, %c0_i32, %c0_i32_0 : i32, i32, i32
  }
  func.func @transform_5(%arg0: i32) -> (i32, i32, i32) {
    %c0_i32 = arith.constant 0 : i32
    %c0_i32_0 = arith.constant 0 : i32
    %c0_i32_1 = arith.constant 0 : i32
    return %arg0, %c0_i32, %c0_i32_0 : i32, i32, i32
  }
  func.func @transform_6(%arg0: i32) -> (i32, i32, i32) {
    %c0_i32 = arith.constant 0 : i32
    %c0_i32_0 = arith.constant 0 : i32
    %c0_i32_1 = arith.constant 0 : i32
    return %arg0, %c0_i32, %c0_i32_0 : i32, i32, i32
  }
  func.func @transform_7(%arg0: i32) -> (i32, i32, i32) {
    %c0_i32 = arith.constant 0 : i32
    %c0_i32_0 = arith.constant 0 : i32
    %c0_i32_1 = arith.constant 0 : i32
    return %arg0, %c0_i32, %c0_i32_0 : i32, i32, i32
  }
  func.func @transform_8(%arg0: i32) -> (i32, i32, i32) {
    %c0_i32 = arith.constant 0 : i32
    %c0_i32_0 = arith.constant 0 : i32
    %c0_i32_1 = arith.constant 0 : i32
    return %arg0, %c0_i32, %c0_i32_0 : i32, i32, i32
  }
}

</mosaic_0001>

<llo_original>
// kernel: tpu_custom_call.1
$region0: #{tpu_custom_call.1}
  #allocation0 [shape = 'u32[]', space=smem, size = 0x4, offset = 0x4, fixed_abs, tag = 'smem constant byte address 0x4 - core index']
  #allocation1 [shape = 'u32[144,128]{1,0:T(1,128)}', space=vmem, size = 0x12000, scoped, tag = 'internal scratch']
  %s0 = inlined_call_operand.vmem [shape: bf16[2,400,4], index: 0, kind: input, shape index: {}]
  %s1 = inlined_call_operand.vmem [shape: bf16[36,256], index: 1, kind: input, shape index: {}]
  %s2 = inlined_call_operand.vmem [shape: f32[80,1], index: 2, kind: input, shape index: {}]
  %s3 = inlined_call_operand.hbm [shape: bf16[2,80,128], index: 3, kind: output, shape index: {0}]
  %s4 = inlined_call_operand.hbm [shape: f32[2,1,128], index: 4, kind: output, shape index: {1}]
  %s5 = inlined_call_operand.hbm [shape: f32[2,1,128], index: 5, kind: output, shape index: {2}]
  %s6 = inlined_call_operand.vmem [shape: bf16[16,10,128], index: 6, kind: output, shape index: {3}]
  %s7 = inlined_call_operand.hbm [shape: f32[2,1,128], index: 7, kind: output, shape index: {4}]
  %s8 = inlined_call_operand.hbm [shape: f32[2,1,128], index: 8, kind: output, shape index: {5}]
  %9 = xla_tuple %s3, %s4, %s5, %s6, %s7, %s8
  %s10 = sld [smem:[#allocation0]]
  $region85: #{tpu_custom_call.1} parent=0
    _
  %s12 = ssub.s32 1, %s10
  %s13 = scalar_select 0, %s12, %s10
  $region1: #{tpu_custom_call.1} parent=0
    #allocation2 [shape = 'u8[40960]{0}', space=vmem, size = 0xa000, scoped, tag = 'output window, operand 0']
    #allocation3 [shape = 's32[2]{0}', space=sflag, size = 0x8, scoped, tag = 'scoped memory for tpu_custom_call.1']
    #allocation4 [shape = 'u8[1024]{0}', space=vmem, size = 0x400, scoped, tag = 'output window, operand 1']
    #allocation5 [shape = 's32[2]{0}', space=sflag, size = 0x8, scoped, tag = 'scoped memory for tpu_custom_call.1']
    #allocation6 [shape = 'u8[1024]{0}', space=vmem, size = 0x400, scoped, tag = 'output window, operand 2']
    #allocation7 [shape = 'u8[1024]{0}', space=vmem, size = 0x400, scoped, tag = 'output window, operand 4']
    #allocation8 [shape = 's32[2]{0}', space=sflag, size = 0x8, scoped, tag = 'scoped memory for tpu_custom_call.1']
    #allocation9 [shape = 'u8[1024]{0}', space=vmem, size = 0x400, scoped, tag = 'output window, operand 5']
    %14 = vsyncpa [#allocation3], 0
    %s15 = scalar_lea.sflag [#allocation3], 1
    %16 = vsyncpa %s15, 0
    %17 = vsyncpa [#allocation5], 0
    %s18 = scalar_lea.sflag [#allocation5], 1
    %19 = vsyncpa %s18, 0
    %20 = vsyncpa [#allocation8], 0
    %s21 = scalar_lea.sflag [#allocation8], 1
    %22 = vsyncpa %s21, 0
    loop: start=0, step=1, limit=4
    $region2: #{tpu_custom_call.1} parent=1 // loop_pre_header
      _
    $region3: #{tpu_custom_call.1} parent=1 // loop_header
      %s24 = sphi 0, %s28
      %p25 = scmp.ge.s32.totalorder %s24, 4
      %s34 = sphi 0, %s36
      %s37 = sphi 0, %s34
      %s38 = sphi 0, %s37
      %s54 = sphi 0, %s38
      %s58 = sphi 0, %s58
      %s60 = sphi 0, %s58
      %s61 = sphi 0, %s60
      %s75 = sphi 0, %s61
      %s79 = sphi 0, %s79
      %s81 = sphi 0, %s79
      %s82 = sphi 0, %s81
      %s96 = sphi 0, %s82
      %s102 = sphi 0, %s104
      %s105 = sphi 0, %s102
      %s106 = sphi 0, %s105
      %s122 = sphi 0, %s106
      %s128 = sphi 0, %s130
      %s131 = sphi 0, %s128
      %s132 = sphi 0, %s131
      %s148 = sphi 0, %s132
      %s154 = sphi 0, %s156
      %s157 = sphi 0, %s154
      %s158 = sphi 0, %s157
      %s174 = sphi 0, %s158
      %s180 = sphi 0, %s182
      %s183 = sphi 0, %s180
      %s184 = sphi 0, %s183
      %s200 = sphi 0, %s184
      %s206 = sphi 0, %s208
      %s209 = sphi 0, %s206
      %s210 = sphi 0, %s209
      %s226 = sphi 0, %s210
      %s232 = sphi 0, %s234
      %s235 = sphi 0, %s232
      %s236 = sphi 0, %s235
      %s252 = sphi 0, %s236
    $region4: #{tpu_custom_call.1} parent=1 // loop_header_branch
      %27 = sbr.rel (%p25) target = $region8
    $region5: #{tpu_custom_call.1} parent=1 // loop_body
      %s29 = ssub.s32 %s24, 1
      %s30 = ssub.s32 %s24, 2
      %s31 = sadd.s32 %s24, 1
      %s32 = ssub.s32 %s24, %s31
      %p33 = scmp.eq.s32.totalorder %s32, 0
      %s35 = sadd.s32 %s34, 1
      %s36 = scalar_select %p33, %s34, %s35
      %p39 = pneg %p33
      %p40 = scmp.eq.s32.totalorder %s24, 1
      %p41 = por %p39, %p40
      %p42 = scmp.ne.s32.totalorder %s34, %s37
      %p43 = scmp.eq.s32.totalorder %s24, 0
      %p44 = por %p42, %p43
      %p45 = scmp.ne.s32.totalorder %s34, %s37
      %p46 = scmp.eq.s32.totalorder %s29, 1
      %p47 = por %p45, %p46
      %p48 = scmp.ne.s32.totalorder %s37, %s38
      %p49 = scmp.eq.s32.totalorder %s29, 0
      %p50 = por %p48, %p49
      %p51 = scmp.ne.s32.totalorder %s37, %s38
      %p52 = scmp.eq.s32.totalorder %s30, 1
      %p53 = por %p51, %p52
      %p55 = scmp.ne.s32.totalorder %s38, %s54
      %p56 = scmp.eq.s32.totalorder %s30, 0
      %p57 = por %p55, %p56
      %s59 = sadd.s32 %s58, 1
      %p62 = scmp.eq.s32.totalorder %s24, 1
      %p63 = scmp.ne.s32.totalorder %s58, %s60
      %p64 = scmp.eq.s32.totalorder %s24, 0
      %p65 = por %p63, %p64
      %p66 = scmp.ne.s32.totalorder %s58, %s60
      %p67 = scmp.eq.s32.totalorder %s29, 1
      %p68 = por %p66, %p67
      %p69 = scmp.ne.s32.totalorder %s60, %s61
      %p70 = scmp.eq.s32.totalorder %s29, 0
      %p71 = por %p69, %p70
      %p72 = scmp.ne.s32.totalorder %s60, %s61
      %p73 = scmp.eq.s32.totalorder %s30, 1
      %p74 = por %p72, %p73
      %p76 = scmp.ne.s32.totalorder %s61, %s75
      %p77 = scmp.eq.s32.totalorder %s30, 0
      %p78 = por %p76, %p77
      %s80 = sadd.s32 %s79, 1
      %p83 = scmp.eq.s32.totalorder %s24, 1
      %p84 = scmp.ne.s32.totalorder %s79, %s81
      %p85 = scmp.eq.s32.totalorder %s24, 0
      %p86 = por %p84, %p85
      %p87 = scmp.ne.s32.totalorder %s79, %s81
      %p88 = scmp.eq.s32.totalorder %s29, 1
      %p89 = por %p87, %p88
      %p90 = scmp.ne.s32.totalorder %s81, %s82
      %p91 = scmp.eq.s32.totalorder %s29, 0
      %p92 = por %p90, %p91
      %p93 = scmp.ne.s32.totalorder %s81, %s82
      %p94 = scmp.eq.s32.totalorder %s30, 1
      %p95 = por %p93, %p94
      %p97 = scmp.ne.s32.totalorder %s82, %s96
      %p98 = scmp.eq.s32.totalorder %s30, 0
      %p99 = por %p97, %p98
      %s100 = ssub.s32 %s24, %s31
      %p101 = scmp.eq.s32.totalorder %s100, 0
      %s103 = sadd.s32 %s102, 1
      %s104 = scalar_select %p101, %s102, %s103
      %p107 = pneg %p101
      %p108 = scmp.eq.s32.totalorder %s24, 1
      %p109 = por %p107, %p108
      %p110 = scmp.ne.s32.totalorder %s102, %s105
      %p111 = scmp.eq.s32.totalorder %s24, 0
      %p112 = por %p110, %p111
      %p113 = scmp.ne.s32.totalorder %s102, %s105
      %p114 = scmp.eq.s32.totalorder %s29, 1
      %p115 = por %p113, %p114
      %p116 = scmp.ne.s32.totalorder %s105, %s106
      %p117 = scmp.eq.s32.totalorder %s29, 0
      %p118 = por %p116, %p117
      %p119 = scmp.ne.s32.totalorder %s105, %s106
      %p120 = scmp.eq.s32.totalorder %s30, 1
      %p121 = por %p119, %p120
      %p123 = scmp.ne.s32.totalorder %s106, %s122
      %p124 = scmp.eq.s32.totalorder %s30, 0
      %p125 = por %p123, %p124
      %s126 = ssub.s32 %s24, %s31
      %p127 = scmp.eq.s32.totalorder %s126, 0
      %s129 = sadd.s32 %s128, 1
      %s130 = scalar_select %p127, %s128, %s129
      %p133 = pneg %p127
      %p134 = scmp.eq.s32.totalorder %s24, 1
      %p135 = por %p133, %p134
      %p136 = scmp.ne.s32.totalorder %s128, %s131
      %p137 = scmp.eq.s32.totalorder %s24, 0
      %p138 = por %p136, %p137
      %p139 = scmp.ne.s32.totalorder %s128, %s131
      %p140 = scmp.eq.s32.totalorder %s29, 1
      %p141 = por %p139, %p140
      %p142 = scmp.ne.s32.totalorder %s131, %s132
      %p143 = scmp.eq.s32.totalorder %s29, 0
      %p144 = por %p142, %p143
      %p145 = scmp.ne.s32.totalorder %s131, %s132
      %p146 = scmp.eq.s32.totalorder %s30, 1
      %p147 = por %p145, %p146
      %p149 = scmp.ne.s32.totalorder %s132, %s148
      %p150 = scmp.eq.s32.totalorder %s30, 0
      %p151 = por %p149, %p150
      %s152 = ssub.s32 %s24, %s31
      %p153 = scmp.eq.s32.totalorder %s152, 0
      %s155 = sadd.s32 %s154, 1
      %s156 = scalar_select %p153, %s154, %s155
      %p159 = pneg %p153
      %p160 = scmp.eq.s32.totalorder %s24, 1
      %p161 = por %p159, %p160
      %p162 = scmp.ne.s32.totalorder %s154, %s157
      %p163 = scmp.eq.s32.totalorder %s24, 0
      %p164 = por %p162, %p163
      %p165 = scmp.ne.s32.totalorder %s154, %s157
      %p166 = scmp.eq.s32.totalorder %s29, 1
      %p167 = por %p165, %p166
      %p168 = scmp.ne.s32.totalorder %s157, %s158
      %p169 = scmp.eq.s32.totalorder %s29, 0
      %p170 = por %p168, %p169
      %p171 = scmp.ne.s32.totalorder %s157, %s158
      %p172 = scmp.eq.s32.totalorder %s30, 1
      %p173 = por %p171, %p172
      %p175 = scmp.ne.s32.totalorder %s158, %s174
      %p176 = scmp.eq.s32.totalorder %s30, 0
      %p177 = por %p175, %p176
      %s178 = ssub.s32 %s24, %s31
      %p179 = scmp.eq.s32.totalorder %s178, 0
      %s181 = sadd.s32 %s180, 1
      %s182 = scalar_select %p179, %s180, %s181
      %p185 = pneg %p179
      %p186 = scmp.eq.s32.totalorder %s24, 1
      %p187 = por %p185, %p186
      %p188 = scmp.ne.s32.totalorder %s180, %s183
      %p189 = scmp.eq.s32.totalorder %s24, 0
      %p190 = por %p188, %p189
      %p191 = scmp.ne.s32.totalorder %s180, %s183
      %p192 = scmp.eq.s32.totalorder %s29, 1
      %p193 = por %p191, %p192
      %p194 = scmp.ne.s32.totalorder %s183, %s184
      %p195 = scmp.eq.s32.totalorder %s29, 0
      %p196 = por %p194, %p195
      %p197 = scmp.ne.s32.totalorder %s183, %s184
      %p198 = scmp.eq.s32.totalorder %s30, 1
      %p199 = por %p197, %p198
      %p201 = scmp.ne.s32.totalorder %s184, %s200
      %p202 = scmp.eq.s32.totalorder %s30, 0
      %p203 = por %p201, %p202
      %s204 = ssub.s32 %s24, %s31
      %p205 = scmp.eq.s32.totalorder %s204, 0
      %s207 = sadd.s32 %s206, 1
      %s208 = scalar_select %p205, %s206, %s207
      %p211 = pneg %p205
      %p212 = scmp.eq.s32.totalorder %s24, 1
      %p213 = por %p211, %p212
      %p214 = scmp.ne.s32.totalorder %s206, %s209
      %p215 = scmp.eq.s32.totalorder %s24, 0
      %p216 = por %p214, %p215
      %p217 = scmp.ne.s32.totalorder %s206, %s209
      %p218 = scmp.eq.s32.totalorder %s29, 1
      %p219 = por %p217, %p218
      %p220 = scmp.ne.s32.totalorder %s209, %s210
      %p221 = scmp.eq.s32.totalorder %s29, 0
      %p222 = por %p220, %p221
      %p223 = scmp.ne.s32.totalorder %s209, %s210
      %p224 = scmp.eq.s32.totalorder %s30, 1
      %p225 = por %p223, %p224
      %p227 = scmp.ne.s32.totalorder %s210, %s226
      %p228 = scmp.eq.s32.totalorder %s30, 0
      %p229 = por %p227, %p228
      %s230 = ssub.s32 %s24, %s31
      %p231 = scmp.eq.s32.totalorder %s230, 0
      %s233 = sadd.s32 %s232, 1
      %s234 = scalar_select %p231, %s232, %s233
      %p237 = pneg %p231
      %p238 = scmp.eq.s32.totalorder %s24, 1
      %p239 = por %p237, %p238
      %p240 = scmp.ne.s32.totalorder %s232, %s235
      %p241 = scmp.eq.s32.totalorder %s24, 0
      %p242 = por %p240, %p241
      %p243 = scmp.ne.s32.totalorder %s232, %s235
      %p244 = scmp.eq.s32.totalorder %s29, 1
      %p245 = por %p243, %p244
      %p246 = scmp.ne.s32.totalorder %s235, %s236
      %p247 = scmp.eq.s32.totalorder %s29, 0
      %p248 = por %p246, %p247
      %p249 = scmp.ne.s32.totalorder %s235, %s236
      %p250 = scmp.eq.s32.totalorder %s30, 1
      %p251 = por %p249, %p250
      %p253 = scmp.ne.s32.totalorder %s236, %s252
      %p254 = scmp.eq.s32.totalorder %s30, 0
      %p255 = por %p253, %p254
      %p256 = scmp.le.s32.totalorder 1, %s24
      %p257 = scmp.lt.s32.totalorder %s24, 3
      %p258 = pnand %p256, %p257
      %p259 = pneg %p258
      // Predicated region
      $region9: #{tpu_custom_call.1} parent=5 // pred_check
        _
      $region10: #{tpu_custom_call.1} parent=5 // pred_check_branch
        %261 = sbr.rel (%p258) target = $region12
      $region11: #{tpu_custom_call.1} parent=5 // pred_region
        %s262 = ssub.s32 %s24, 1
        // Predicated region
        $region13: #{tpu_custom_call.1} parent=11 // pred_check
          %p263 = pneg %p71
        $region14: #{tpu_custom_call.1} parent=11 // pred_check_branch
          %265 = sbr.rel (%p263) target = $region16
        $region15: #{tpu_custom_call.1} parent=11 // pred_region
          _
        $region16: #{tpu_custom_call.1} parent=11 // pred_fallthru
          _
        // Predicated region
        $region17: #{tpu_custom_call.1} parent=11 // pred_check
          %p266 = pneg %p92
        $region18: #{tpu_custom_call.1} parent=11 // pred_check_branch
          %268 = sbr.rel (%p266) target = $region20
        $region19: #{tpu_custom_call.1} parent=11 // pred_region
          _
        $region20: #{tpu_custom_call.1} parent=11 // pred_fallthru
          _
      $region12: #{tpu_custom_call.1} parent=5 // pred_fallthru
        _
      %p269 = scmp.lt.s32.totalorder %s24, 2
      // Predicated region
      $region21: #{tpu_custom_call.1} parent=5 // pred_check
        %p270 = pneg %p269
      $region22: #{tpu_custom_call.1} parent=5 // pred_check_branch
        %272 = sbr.rel (%p270) target = $region24
      $region23: #{tpu_custom_call.1} parent=5 // pred_region
        // Predicated region
        $region25: #{tpu_custom_call.1} parent=23 // pred_check
          %p273 = pneg %p44
        $region26: #{tpu_custom_call.1} parent=23 // pred_check_branch
          %275 = sbr.rel (%p273) target = $region28
        $region27: #{tpu_custom_call.1} parent=23 // pred_region
          %p276 = scmp.lt.s32.totalorder %s24, 1
          %s277 = scalar_select %p276, %s24, 1
          %s278 = smul.addr %s277, 50
          %s279 = smul.addr %s278, 4
          %s280 = scalar_lea.vmem %s0, %s279
        $region28: #{tpu_custom_call.1} parent=23 // pred_fallthru
          _
      $region24: #{tpu_custom_call.1} parent=5 // pred_fallthru
        _
      %p281 = scmp.le.s32.totalorder 1, %s24
      %p282 = scmp.lt.s32.totalorder %s24, 3
      %p283 = pnand %p281, %p282
      %p284 = pneg %p283
      // Predicated region
      $region29: #{tpu_custom_call.1} parent=5 // pred_check
        _
      $region30: #{tpu_custom_call.1} parent=5 // pred_check_branch
        %286 = sbr.rel (%p283) target = $region32
      $region31: #{tpu_custom_call.1} parent=5 // pred_region
        %s287 = ssub.s32 %s24, 1
        %p288 = scmp.lt.s32.totalorder %s29, 1
        %s289 = scalar_select %p288, %s29, 1
        %s290 = smul.addr %s289, 50
        %s291 = smul.addr %s290, 4
        %s292 = scalar_lea.vmem %s0, %s291
        %p293 = pneg %p50
        %p294 = pneg %p47
        %p295 = pneg %p71
        %p296 = pneg %p68
        %p297 = pneg %p92
        %p298 = pneg %p89
        %p299 = pneg %p118
        %p300 = pneg %p115
        %s301 = sand.u32 %s105, 1
        %s302 = scalar_lea.sflag [#allocation3], %s301
        %s303 = sand.u32 %s105, 1
        %s304 = smul.addr %s303, 40
        %s305 = scalar_lea.vmem [#allocation2], %s304
        %p306 = pneg %p144
        %p307 = pneg %p141
        %s308 = sand.u32 %s29, 1
        %s309 = scalar_lea.sflag [#allocation5], %s308
        %s310 = sand.u32 %s131, 1
        %s311 = scalar_lea.vmem [#allocation4], %s310
        %p312 = pneg %p170
        %p313 = pneg %p167
        %s314 = sand.u32 %s29, 1
        %s315 = scalar_lea.sflag [#allocation5], %s314
        %s316 = sand.u32 %s157, 1
        %s317 = scalar_lea.vmem [#allocation6], %s316
        %p318 = pneg %p196
        %p319 = pneg %p193
        %s320 = smul.u32 8, %s29
        %p321 = scmp.lt.s32.totalorder %s320, 15
        %s322 = scalar_select %p321, %s320, 15
        %s323 = smul.addr %s322, 2
        %s324 = smul.addr %s323, 4
        %s325 = scalar_lea.vmem %s6, %s324
        %p326 = pneg %p222
        %p327 = pneg %p219
        %s328 = sand.u32 %s29, 1
        %s329 = scalar_lea.sflag [#allocation8], %s328
        %s330 = sand.u32 %s209, 1
        %s331 = scalar_lea.vmem [#allocation7], %s330
        %p332 = pneg %p248
        %p333 = pneg %p245
        %s334 = sand.u32 %s29, 1
        %s335 = scalar_lea.sflag [#allocation8], %s334
        %s336 = sand.u32 %s235, 1
        %s337 = scalar_lea.vmem [#allocation9], %s336
        %p338 = scmp.lt.s32.totalorder %s29, 1
        %s339 = scalar_select %p338, %s29, 1
        %s340 = smul.addr %s339, 50
        %s341 = smul.addr %s340, 4
        %s342 = scalar_lea.vmem %s0, %s341
        %s343 = smul.u32 8, %s29
        %p344 = scmp.lt.s32.totalorder %s343, 15
        %s345 = scalar_select %p344, %s343, 15
        %s346 = smul.addr %s345, 2
        %s347 = smul.addr %s346, 4
        %s348 = scalar_lea.vmem %s6, %s347
        %s349 = smul.u32 8, %s29
        %v351 = vld [vmem:[%s2] sm:$0xff]
        %v352 = vld [vmem:[%s2 + $0x8] sm:$0xff]
        %v353 = vld [vmem:[%s2 + $0x10] sm:$0xff]
        %v354 = vld [vmem:[%s2 + $0x18] sm:$0xff]
        %v355 = vld [vmem:[%s2 + $0x20] sm:$0xff]
        %v356 = vld [vmem:[%s2 + $0x28] sm:$0xff]
        %v357 = vld [vmem:[%s2 + $0x30] sm:$0xff]
        %v358 = vld [vmem:[%s2 + $0x38] sm:$0xff]
        %v359 = vld [vmem:[%s2 + $0x40] sm:$0xff]
        %v360 = vld [vmem:[%s2 + $0x48] sm:$0xff]
        %v361 = vld [vmem:[%s342] sm:$0xf]
        %v362 = vld [vmem:[%s342 + $0x4] sm:$0xf]
        %v363 = vld [vmem:[%s342 + $0x8] sm:$0xf]
        %v364 = vld [vmem:[%s342 + $0xc] sm:$0xf]
        %v365 = vld [vmem:[%s342 + $0x10] sm:$0xf]
        %v366 = vld [vmem:[%s342 + $0x14] sm:$0xf]
        %v367 = vld [vmem:[%s342 + $0x18] sm:$0xf]
        %v368 = vld [vmem:[%s342 + $0x1c] sm:$0xf]
        %v369 = vld [vmem:[%s342 + $0x20] sm:$0xf]
        %v370 = vld [vmem:[%s342 + $0x24] sm:$0xf]
        %v371 = vld [vmem:[%s342 + $0x30] sm:$0xc]
        %v372 = vld [vmem:[%s342 + $0x34] sm:$0xf]
        %v373 = vld [vmem:[%s342 + $0x38] sm:$0xf]
        %v374 = vld [vmem:[%s342 + $0x3c] sm:$0xf]
        %v375 = vld [vmem:[%s342 + $0x40] sm:$0xf]
        %v376 = vld [vmem:[%s342 + $0x44] sm:$0xf]
        %v377 = vld [vmem:[%s342 + $0x48] sm:$0xf]
        %v378 = vld [vmem:[%s342 + $0x4c] sm:$0xf]
        %v379 = vld [vmem:[%s342 + $0x50] sm:$0xf]
        %v380 = vld [vmem:[%s342 + $0x54] sm:$0xf]
        %v381 = vld [vmem:[%s342 + $0x58] sm:$0x3]
        %v382 = vld [vmem:[%s342 + $0x28] sm:$0x1]
        %v383 = vld [vmem:[%s342 + $0x64] sm:$0xf]
        %v384 = vld [vmem:[%s342 + $0x68] sm:$0xf]
        %v385 = vld [vmem:[%s342 + $0x6c] sm:$0xf]
        %v386 = vld [vmem:[%s342 + $0x70] sm:$0xf]
        %v387 = vld [vmem:[%s342 + $0x74] sm:$0xf]
        %v388 = vld [vmem:[%s342 + $0x78] sm:$0xf]
        %v389 = vld [vmem:[%s342 + $0x7c] sm:$0xf]
        %v390 = vld [vmem:[%s342 + $0x80] sm:$0xf]
        %v391 = vld [vmem:[%s342 + $0x84] sm:$0xf]
        %v392 = vld [vmem:[%s342 + $0x88] sm:$0xf]
        %v393 = vld [vmem:[%s342 + $0x94] sm:$0xc]
        %v394 = vld [vmem:[%s342 + $0x98] sm:$0xf]
        %v395 = vld [vmem:[%s342 + $0x9c] sm:$0xf]
        %v396 = vld [vmem:[%s342 + $0xa0] sm:$0xf]
        %v397 = vld [vmem:[%s342 + $0xa4] sm:$0xf]
        %v398 = vld [vmem:[%s342 + $0xa8] sm:$0xf]
        %v399 = vld [vmem:[%s342 + $0xac] sm:$0xf]
        %v400 = vld [vmem:[%s342 + $0xb0] sm:$0xf]
        %v401 = vld [vmem:[%s342 + $0xb4] sm:$0xf]
        %v402 = vld [vmem:[%s342 + $0xb8] sm:$0xf]
        %v403 = vld [vmem:[%s342 + $0xbc] sm:$0x3]
        %v404 = vld [vmem:[%s342 + $0x8c] sm:$0x1]
        %v405 = vld [vmem:[%s342 + $0x4] sm:$0xe]
        %v406 = vld [vmem:[%s342 + $0x28] sm:$0xf]
        %v407 = vld [vmem:[%s342 + $0x2c] sm:$0x1]
        %v408 = vld [vmem:[%s342 + $0x34] sm:$0x8]
        %v409 = vld [vmem:[%s342 + $0x58] sm:$0xf]
        %v410 = vld [vmem:[%s342 + $0x5c] sm:$0x7]
        %v411 = vld [vmem:[%s342 + $0x2c] sm:$0x3]
        %v422 = vunpack.c.l.b16 %v361
        %v423 = vunpack.c.l.b16 %v362
        %v424 = vunpack.c.l.b16 %v363
        %v425 = vunpack.c.l.b16 %v364
        %v426 = vunpack.c.l.b16 %v365
        %v427 = vunpack.c.l.b16 %v366
        %v428 = vunpack.c.l.b16 %v367
        %v429 = vunpack.c.l.b16 %v368
        %v430 = vunpack.c.l.b16 %v369
        %v431 = vunpack.c.l.b16 %v370
        %v432 = vpack.c.b16 %v423, %v422
        %v433 = vpack.c.b16 %v425, %v424
        %v434 = vpack.c.b16 %v427, %v426
        %v435 = vpack.c.b16 %v429, %v428
        %v436 = vpack.c.b16 %v431, %v430
        %v448 = vunpack.c.l.b16 %v371
        %v449 = vunpack.c.l.b16 %v372
        %v450 = vunpack.c.l.b16 %v373
        %v451 = vunpack.c.l.b16 %v374
        %v452 = vunpack.c.l.b16 %v375
        %v453 = vunpack.c.l.b16 %v376
        %v454 = vunpack.c.l.b16 %v377
        %v455 = vunpack.c.l.b16 %v378
        %v456 = vunpack.c.l.b16 %v379
        %v457 = vunpack.c.l.b16 %v380
        %v458 = vunpack.c.l.b16 %v381
        %v459 = vpack.c.b16 %v449, %v448
        %v460 = vpack.c.b16 %v451, %v450
        %v461 = vpack.c.b16 %v453, %v452
        %v462 = vpack.c.b16 %v455, %v454
        %v463 = vpack.c.b16 %v457, %v456
        %v464 = vpack.c.b16 %v458, %v458
        %vm465 = vcmask 1045504
        %v466 = vrot.slane %v459, 2
        %v467 = vrot.slane %v460, 2
        %v468 = vsel %vm465, %v466, %v467
        %v469 = vrot.slane %v461, 2
        %v470 = vsel %vm465, %v467, %v469
        %v471 = vrot.slane %v462, 2
        %v472 = vsel %vm465, %v469, %v471
        %v473 = vrot.slane %v463, 2
        %v474 = vsel %vm465, %v471, %v473
        %v475 = vrot.slane %v464, 2
        %v476 = vsel %vm465, %v473, %v475
        %477 = vrot.lane.b32.xlu0 %v468, 4
        %v478 = vpop.permute.xlu0 %477
        %479 = vrot.lane.b32.xlu0 %v470, 4
        %v480 = vpop.permute.xlu0 %479
        %481 = vrot.lane.b32.xlu0 %v472, 4
        %v482 = vpop.permute.xlu0 %481
        %483 = vrot.lane.b32.xlu0 %v474, 4
        %v484 = vpop.permute.xlu0 %483
        %485 = vrot.lane.b32.xlu0 %v476, 4
        %v486 = vpop.permute.xlu0 %485
        %v488 = vunpack.c.l.b16 %v382
        %v489 = vpack.c.b16 %v488, %v488
        %vm490 = vsmask.f32 7424
        %v492 = vshrl.u32 %v432, 16
        %v494 = vshll.u32 %v432, 16
        %v496 = vrot.slane %v494, 1
        %v497 = vor.u32 %v492, %v496
        %v499 = vshll.u32 %v433, 16
        %v501 = vrot.slane %v499, 1
        %v502 = vsel %vm490, %v497, %v501
        %v503 = vshrl.u32 %v433, 16
        %v505 = vor.u32 %v503, %v501
        %v507 = vshll.u32 %v434, 16
        %v509 = vrot.slane %v507, 1
        %v510 = vsel %vm490, %v505, %v509
        %v511 = vshrl.u32 %v434, 16
        %v513 = vor.u32 %v511, %v509
        %v515 = vshll.u32 %v435, 16
        %v517 = vrot.slane %v515, 1
        %v518 = vsel %vm490, %v513, %v517
        %v519 = vshrl.u32 %v435, 16
        %v521 = vor.u32 %v519, %v517
        %v523 = vshll.u32 %v436, 16
        %v525 = vrot.slane %v523, 1
        %v526 = vsel %vm490, %v521, %v525
        %v527 = vshrl.u32 %v436, 16
        %v529 = vor.u32 %v527, %v525
        %v531 = vshll.u32 %v489, 16
        %v533 = vrot.slane %v531, 1
        %v534 = vsel %vm490, %v529, %v533
        %535 = vrot.lane.b32.xlu0 %v502, 8
        %v536 = vpop.permute.xlu0 %535
        %537 = vrot.lane.b32.xlu0 %v510, 8
        %v538 = vpop.permute.xlu0 %537
        %539 = vrot.lane.b32.xlu0 %v518, 8
        %v540 = vpop.permute.xlu0 %539
        %541 = vrot.lane.b32.xlu0 %v526, 8
        %v542 = vpop.permute.xlu0 %541
        %543 = vrot.lane.b32.xlu0 %v534, 8
        %v544 = vpop.permute.xlu0 %543
        %v555 = vunpack.c.l.b16 %v383
        %v556 = vunpack.c.l.b16 %v384
        %v557 = vunpack.c.l.b16 %v385
        %v558 = vunpack.c.l.b16 %v386
        %v559 = vunpack.c.l.b16 %v387
        %v560 = vunpack.c.l.b16 %v388
        %v561 = vunpack.c.l.b16 %v389
        %v562 = vunpack.c.l.b16 %v390
        %v563 = vunpack.c.l.b16 %v391
        %v564 = vunpack.c.l.b16 %v392
        %v565 = vpack.c.b16 %v556, %v555
        %v566 = vpack.c.b16 %v558, %v557
        %v567 = vpack.c.b16 %v560, %v559
        %v568 = vpack.c.b16 %v562, %v561
        %v569 = vpack.c.b16 %v564, %v563
        %570 = vrot.lane.b32.xlu0 %v565, 12
        %v571 = vpop.permute.xlu0 %570
        %572 = vrot.lane.b32.xlu0 %v566, 12
        %v573 = vpop.permute.xlu0 %572
        %574 = vrot.lane.b32.xlu0 %v567, 12
        %v575 = vpop.permute.xlu0 %574
        %576 = vrot.lane.b32.xlu0 %v568, 12
        %v577 = vpop.permute.xlu0 %576
        %578 = vrot.lane.b32.xlu0 %v569, 12
        %v579 = vpop.permute.xlu0 %578
        %v591 = vunpack.c.l.b16 %v393
        %v592 = vunpack.c.l.b16 %v394
        %v593 = vunpack.c.l.b16 %v395
        %v594 = vunpack.c.l.b16 %v396
        %v595 = vunpack.c.l.b16 %v397
        %v596 = vunpack.c.l.b16 %v398
        %v597 = vunpack.c.l.b16 %v399
        %v598 = vunpack.c.l.b16 %v400
        %v599 = vunpack.c.l.b16 %v401
        %v600 = vunpack.c.l.b16 %v402
        %v601 = vunpack.c.l.b16 %v403
        %v602 = vpack.c.b16 %v592, %v591
        %v603 = vpack.c.b16 %v594, %v593
        %v604 = vpack.c.b16 %v596, %v595
        %v605 = vpack.c.b16 %v598, %v597
        %v606 = vpack.c.b16 %v600, %v599
        %v607 = vpack.c.b16 %v601, %v601
        %v608 = vrot.slane %v602, 2
        %v609 = vrot.slane %v603, 2
        %v610 = vsel %vm465, %v608, %v609
        %v611 = vrot.slane %v604, 2
        %v612 = vsel %vm465, %v609, %v611
        %v613 = vrot.slane %v605, 2
        %v614 = vsel %vm465, %v611, %v613
        %v615 = vrot.slane %v606, 2
        %v616 = vsel %vm465, %v613, %v615
        %v617 = vrot.slane %v607, 2
        %v618 = vsel %vm465, %v615, %v617
        %619 = vrot.lane.b32.xlu0 %v610, 16
        %v620 = vpop.permute.xlu0 %619
        %621 = vrot.lane.b32.xlu0 %v612, 16
        %v622 = vpop.permute.xlu0 %621
        %623 = vrot.lane.b32.xlu0 %v614, 16
        %v624 = vpop.permute.xlu0 %623
        %625 = vrot.lane.b32.xlu0 %v616, 16
        %v626 = vpop.permute.xlu0 %625
        %627 = vrot.lane.b32.xlu0 %v618, 16
        %v628 = vpop.permute.xlu0 %627
        %v630 = vunpack.c.l.b16 %v404
        %v631 = vpack.c.b16 %v630, %v630
        %v633 = vshrl.u32 %v565, 16
        %v635 = vshll.u32 %v565, 16
        %v637 = vrot.slane %v635, 1
        %v638 = vor.u32 %v633, %v637
        %v640 = vshll.u32 %v566, 16
        %v642 = vrot.slane %v640, 1
        %v643 = vsel %vm490, %v638, %v642
        %v644 = vshrl.u32 %v566, 16
        %v646 = vor.u32 %v644, %v642
        %v648 = vshll.u32 %v567, 16
        %v650 = vrot.slane %v648, 1
        %v651 = vsel %vm490, %v646, %v650
        %v652 = vshrl.u32 %v567, 16
        %v654 = vor.u32 %v652, %v650
        %v656 = vshll.u32 %v568, 16
        %v658 = vrot.slane %v656, 1
        %v659 = vsel %vm490, %v654, %v658
        %v660 = vshrl.u32 %v568, 16
        %v662 = vor.u32 %v660, %v658
        %v664 = vshll.u32 %v569, 16
        %v666 = vrot.slane %v664, 1
        %v667 = vsel %vm490, %v662, %v666
        %v668 = vshrl.u32 %v569, 16
        %v670 = vor.u32 %v668, %v666
        %v672 = vshll.u32 %v631, 16
        %v674 = vrot.slane %v672, 1
        %v675 = vsel %vm490, %v670, %v674
        %676 = vrot.lane.b32.xlu0 %v643, 20
        %v677 = vpop.permute.xlu0 %676
        %678 = vrot.lane.b32.xlu0 %v651, 20
        %v679 = vpop.permute.xlu0 %678
        %680 = vrot.lane.b32.xlu0 %v659, 20
        %v681 = vpop.permute.xlu0 %680
        %682 = vrot.lane.b32.xlu0 %v667, 20
        %v683 = vpop.permute.xlu0 %682
        %684 = vrot.lane.b32.xlu0 %v675, 20
        %v685 = vpop.permute.xlu0 %684
        %v689 = vunpack.c.l.b16 %v405
        %v690 = vunpack.c.l.b16 %v406
        %v691 = vunpack.c.l.b16 %v407
        %v692 = vpack.c.b16 %v424, %v689
        %v693 = vpack.c.b16 %v426, %v425
        %v694 = vpack.c.b16 %v428, %v427
        %v695 = vpack.c.b16 %v430, %v429
        %v696 = vpack.c.b16 %v690, %v431
        %v697 = vpack.c.b16 %v691, %v691
        %vm698 = vcmask 1046528
        %v699 = vrot.slane %v692, 1
        %v700 = vrot.slane %v693, 1
        %v701 = vsel %vm698, %v699, %v700
        %v702 = vrot.slane %v694, 1
        %v703 = vsel %vm698, %v700, %v702
        %v704 = vrot.slane %v695, 1
        %v705 = vsel %vm698, %v702, %v704
        %v706 = vrot.slane %v696, 1
        %v707 = vsel %vm698, %v704, %v706
        %v708 = vrot.slane %v697, 1
        %v709 = vsel %vm698, %v706, %v708
        %710 = vrot.lane.b32.xlu0 %v701, 24
        %v711 = vpop.permute.xlu0 %710
        %712 = vrot.lane.b32.xlu0 %v703, 24
        %v713 = vpop.permute.xlu0 %712
        %714 = vrot.lane.b32.xlu0 %v705, 24
        %v715 = vpop.permute.xlu0 %714
        %716 = vrot.lane.b32.xlu0 %v707, 24
        %v717 = vpop.permute.xlu0 %716
        %718 = vrot.lane.b32.xlu0 %v709, 24
        %v719 = vpop.permute.xlu0 %718
        %v723 = vunpack.c.l.b16 %v408
        %v724 = vunpack.c.l.b16 %v409
        %v725 = vunpack.c.l.b16 %v410
        %v726 = vpack.c.b16 %v450, %v723
        %v727 = vpack.c.b16 %v452, %v451
        %v728 = vpack.c.b16 %v454, %v453
        %v729 = vpack.c.b16 %v456, %v455
        %v730 = vpack.c.b16 %v724, %v457
        %v731 = vpack.c.b16 %v725, %v725
        %vm732 = vcmask 1044480
        %v733 = vrot.slane %v726, 3
        %v734 = vrot.slane %v727, 3
        %v735 = vsel %vm732, %v733, %v734
        %v736 = vrot.slane %v728, 3
        %v737 = vsel %vm732, %v734, %v736
        %v738 = vrot.slane %v729, 3
        %v739 = vsel %vm732, %v736, %v738
        %v740 = vrot.slane %v730, 3
        %v741 = vsel %vm732, %v738, %v740
        %v742 = vrot.slane %v731, 3
        %v743 = vsel %vm732, %v740, %v742
        %744 = vrot.lane.b32.xlu0 %v735, 28
        %v745 = vpop.permute.xlu0 %744
        %746 = vrot.lane.b32.xlu0 %v737, 28
        %v747 = vpop.permute.xlu0 %746
        %748 = vrot.lane.b32.xlu0 %v739, 28
        %v749 = vpop.permute.xlu0 %748
        %750 = vrot.lane.b32.xlu0 %v741, 28
        %v751 = vpop.permute.xlu0 %750
        %752 = vrot.lane.b32.xlu0 %v743, 28
        %v753 = vpop.permute.xlu0 %752
        %v755 = vunpack.c.l.b16 %v411
        %v756 = vpack.c.b16 %v755, %v755
        %vm757 = vsmask.f32 6400
        %v759 = vshrl.u32 %v692, 16
        %v761 = vrot.slane %v759, 1
        %v762 = vshll.u32 %v692, 16
        %v764 = vrot.slane %v762, 2
        %v765 = vor.u32 %v761, %v764
        %v767 = vshrl.u32 %v693, 16
        %v769 = vrot.slane %v767, 1
        %v770 = vshll.u32 %v693, 16
        %v772 = vrot.slane %v770, 2
        %v773 = vor.u32 %v769, %v772
        %v774 = vsel %vm757, %v765, %v773
        %v776 = vshrl.u32 %v694, 16
        %v778 = vrot.slane %v776, 1
        %v779 = vshll.u32 %v694, 16
        %v781 = vrot.slane %v779, 2
        %v782 = vor.u32 %v778, %v781
        %v783 = vsel %vm757, %v773, %v782
        %v785 = vshrl.u32 %v695, 16
        %v787 = vrot.slane %v785, 1
        %v788 = vshll.u32 %v695, 16
        %v790 = vrot.slane %v788, 2
        %v791 = vor.u32 %v787, %v790
        %v792 = vsel %vm757, %v782, %v791
        %v794 = vshrl.u32 %v696, 16
        %v796 = vrot.slane %v794, 1
        %v797 = vshll.u32 %v696, 16
        %v799 = vrot.slane %v797, 2
        %v800 = vor.u32 %v796, %v799
        %v801 = vsel %vm757, %v791, %v800
        %v803 = vshrl.u32 %v756, 16
        %v805 = vrot.slane %v803, 1
        %v806 = vshll.u32 %v756, 16
        %v808 = vrot.slane %v806, 2
        %v809 = vor.u32 %v805, %v808
        %v810 = vsel %vm757, %v800, %v809
        %811 = vrot.lane.b32.xlu0 %v774, 32
        %v812 = vpop.permute.xlu0 %811
        %813 = vrot.lane.b32.xlu0 %v783, 32
        %v814 = vpop.permute.xlu0 %813
        %815 = vrot.lane.b32.xlu0 %v792, 32
        %v816 = vpop.permute.xlu0 %815
        %817 = vrot.lane.b32.xlu0 %v801, 32
        %v818 = vpop.permute.xlu0 %817
        %819 = vrot.lane.b32.xlu0 %v810, 32
        %v820 = vpop.permute.xlu0 %819
        %vm821 = vcmask 31744
        %v823 = vsel %vm821, %v432, %v478
        %v825 = vsel %vm821, %v433, %v480
        %v827 = vsel %vm821, %v434, %v482
        %v829 = vsel %vm821, %v435, %v484
        %v831 = vsel %vm821, %v436, %v486
        %vm832 = vcmask 64512
        %v834 = vsel %vm832, %v823, %v536
        %v836 = vsel %vm832, %v825, %v538
        %v838 = vsel %vm832, %v827, %v540
        %v840 = vsel %vm832, %v829, %v542
        %v842 = vsel %vm832, %v831, %v544
        %vm843 = vcmask 97280
        %v845 = vsel %vm843, %v834, %v571
        %v847 = vsel %vm843, %v836, %v573
        %v849 = vsel %vm843, %v838, %v575
        %v851 = vsel %vm843, %v840, %v577
        %v853 = vsel %vm843, %v842, %v579
        %vm854 = vcmask 130048
        %v856 = vsel %vm854, %v845, %v620
        %v858 = vsel %vm854, %v847, %v622
        %v860 = vsel %vm854, %v849, %v624
        %v862 = vsel %vm854, %v851, %v626
        %v864 = vsel %vm854, %v853, %v628
        %vm865 = vcmask 162816
        %v867 = vsel %vm865, %v856, %v677
        %v869 = vsel %vm865, %v858, %v679
        %v871 = vsel %vm865, %v860, %v681
        %v873 = vsel %vm865, %v862, %v683
        %v875 = vsel %vm865, %v864, %v685
        %vm876 = vcmask 195584
        %v878 = vsel %vm876, %v867, %v711
        %v880 = vsel %vm876, %v869, %v713
        %v882 = vsel %vm876, %v871, %v715
        %v884 = vsel %vm876, %v873, %v717
        %v886 = vsel %vm876, %v875, %v719
        %vm887 = vcmask 228352
        %v889 = vsel %vm887, %v878, %v745
        %v891 = vsel %vm887, %v880, %v747
        %v893 = vsel %vm887, %v882, %v749
        %v895 = vsel %vm887, %v884, %v751
        %v897 = vsel %vm887, %v886, %v753
        %vm898 = vcmask 261120
        %v900 = vsel %vm898, %v889, %v812
        %v902 = vsel %vm898, %v891, %v814
        %v904 = vsel %vm898, %v893, %v816
        %v906 = vsel %vm898, %v895, %v818
        %v908 = vsel %vm898, %v897, %v820
        %v909 = vld [vmem:[%s1] sm:$0xff]
        %v910 = vld [vmem:[%s1 + $0x8] sm:$0xff]
        %v911 = vld [vmem:[%s1 + $0x10] sm:$0xff]
        %v912 = vld [vmem:[%s1 + $0x18] sm:$0xff]
        %v913 = vld [vmem:[%s1 + $0x20] sm:$0x33]
        %v919 = vunpack.c.l.b16 %v909
        %v920 = vunpack.c.h.b16 %v909
        %v921 = vunpack.c.l.b16 %v910
        %v922 = vunpack.c.h.b16 %v910
        %v923 = vunpack.c.l.b16 %v911
        %v924 = vunpack.c.h.b16 %v911
        %v925 = vunpack.c.l.b16 %v912
        %v926 = vunpack.c.h.b16 %v912
        %v927 = vunpack.c.l.b16 %v913
        %v928 = vunpack.c.h.b16 %v913
        %v929 = vpack.c.b16 %v921, %v919
        %v930 = vpack.c.b16 %v922, %v920
        %v931 = vpack.c.b16 %v925, %v923
        %v932 = vpack.c.b16 %v926, %v924
        %v933 = vpack.c.b16 %v927, %v927
        %v934 = vpack.c.b16 %v928, %v928
        %vm939 = vcmask 293888
        %v940 = vsel %vm939, %v900, 0
        %v942 = vsel %vm939, %v902, 0
        %v944 = vsel %vm939, %v904, 0
        %v946 = vsel %vm939, %v906, 0
        %v948 = vsel %vm939, %v908, 0
        %vm950 = vcmask 1041408
        %v952 = vsel %vm950, %v933, 0
        %v955 = vsel %vm950, %v934, 0
        %957 = vmatprep.subr.bf16.mxu0 %v930
        %958 = vmatpush1.bf16.msra.mxu0 %v929
        %959 = vmatprep.subr.bf16.mxu0 %v932
        %960 = vmatpush1.bf16.msra.mxu0 %v931
        %961 = vmatprep.subr.bf16.mxu0 %v955
        %962 = vmatpush1.bf16.msra.mxu0 %v952
        %963 = vmatprep.subr.bf16.mxu0 0
        %964 = vmatpush1.bf16.msra.mxu0 0
        %965 = vmatprep.subr.bf16.mxu0 0
        %966 = vmatpush1.bf16.msra.mxu0 0
        %967 = vmatprep.subr.bf16.mxu0 0
        %968 = vmatpush1.bf16.msra.mxu0 0
        %969 = vmatprep.subr.bf16.mxu0 0
        %970 = vmatpush1.bf16.msra.mxu0 0
        %971 = vmatprep.subr.bf16.mxu0 0
        %972 = vmatpush1.bf16.msra.mxu0 0
        %973 = vmatprep.subr.bf16.mxu0 0
        %974 = vmatpush1.bf16.msra.mxu0 0
        %975 = vmatprep.subr.bf16.mxu0 0
        %976 = vmatpush1.bf16.msra.mxu0 0
        %977 = vmatprep.subr.bf16.mxu0 0
        %978 = vmatpush1.bf16.msra.mxu0 0
        %979 = vmatprep.subr.bf16.mxu0 0
        %980 = vmatpush1.bf16.msra.mxu0 0
        %981 = vmatprep.subr.bf16.mxu0 0
        %982 = vmatpush1.bf16.msra.mxu0 0
        %983 = vmatprep.subr.bf16.mxu0 0
        %984 = vmatpush1.bf16.msra.mxu0 0
        %985 = vmatprep.subr.bf16.mxu0 0
        %986 = vmatpush1.bf16.msra.mxu0 0
        %987 = vmatprep.subr.bf16.mxu0 0
        %988 = vmatpush1.bf16.msra.mxu0 0
        %989 = vmatprep.mubr.bf16.mxu0 0
        %990 = vmatmul.mubr.bf16.gmra.mrb[0].mxu0 %v940
        %v991 = vpop.f32.mrb[0].mxu0
        %v992 = vadd.f32 0.0, %v991
        %v993 = vpop.f32.mrb[0].mxu0
        %v994 = vadd.f32 0.0, %v993
        %v995 = vpop.f32.mrb[0].mxu0
        %v996 = vadd.f32 0.0, %v995
        %v997 = vpop.f32.mrb[0].mxu0
        %v998 = vadd.f32 0.0, %v997
        %999 = vmatprep.mubr.bf16.mxu0 0
        %1000 = vmatmul.mubr.bf16.gmra.mrb[0].mxu0 %v942
        %v1001 = vpop.f32.mrb[0].mxu0
        %v1002 = vadd.f32 0.0, %v1001
        %v1003 = vpop.f32.mrb[0].mxu0
        %v1004 = vadd.f32 0.0, %v1003
        %v1005 = vpop.f32.mrb[0].mxu0
        %v1006 = vadd.f32 0.0, %v1005
        %v1007 = vpop.f32.mrb[0].mxu0
        %v1008 = vadd.f32 0.0, %v1007
        %1009 = vmatprep.mubr.bf16.mxu0 0
        %1010 = vmatmul.mubr.bf16.gmra.mrb[0].mxu0 %v944
        %v1011 = vpop.f32.mrb[0].mxu0
        %v1012 = vadd.f32 0.0, %v1011
        %v1013 = vpop.f32.mrb[0].mxu0
        %v1014 = vadd.f32 0.0, %v1013
        %v1015 = vpop.f32.mrb[0].mxu0
        %v1016 = vadd.f32 0.0, %v1015
        %v1017 = vpop.f32.mrb[0].mxu0
        %v1018 = vadd.f32 0.0, %v1017
        %1019 = vmatprep.mubr.bf16.mxu0 0
        %1020 = vmatmul.mubr.bf16.gmra.mrb[0].mxu0 %v946
        %v1021 = vpop.f32.mrb[0].mxu0
        %v1022 = vadd.f32 0.0, %v1021
        %v1023 = vpop.f32.mrb[0].mxu0
        %v1024 = vadd.f32 0.0, %v1023
        %v1025 = vpop.f32.mrb[0].mxu0
        %v1026 = vadd.f32 0.0, %v1025
        %v1027 = vpop.f32.mrb[0].mxu0
        %v1028 = vadd.f32 0.0, %v1027
        %1029 = vmatprep.mubr.bf16.mxu0 0
        %1030 = vmatmul.mubr.bf16.gmra.mrb[0].mxu0 %v948
        %v1031 = vpop.f32.mrb[0].mxu0
        %v1032 = vadd.f32 0.0, %v1031
        %v1033 = vpop.f32.mrb[0].mxu0
        %v1034 = vadd.f32 0.0, %v1033
        %v1035 = vpop.f32.mrb[0].mxu0
        %v1036 = vadd.f32 0.0, %v1035
        %v1037 = vpop.f32.mrb[0].mxu0
        %v1038 = vadd.f32 0.0, %v1037
        %1039 = vdwg.mxu0
        %v1040 = vpack.c.bf16 %v996, %v992
        %v1041 = vpack.c.bf16 %v1006, %v1002
        %v1042 = vpack.c.bf16 %v1016, %v1012
        %v1043 = vpack.c.bf16 %v1026, %v1022
        %v1044 = vpack.c.bf16 %v1036, %v1032
        %v1050 = vunpack.c.l.b16 %v1040
        %v1051 = vunpack.c.h.b16 %v1040
        %v1052 = vunpack.c.l.b16 %v1041
        %v1053 = vunpack.c.h.b16 %v1041
        %v1054 = vunpack.c.l.b16 %v1042
        %v1055 = vunpack.c.h.b16 %v1042
        %v1056 = vunpack.c.l.b16 %v1043
        %v1057 = vunpack.c.h.b16 %v1043
        %v1058 = vunpack.c.l.b16 %v1044
        %v1059 = vunpack.c.h.b16 %v1044
        %v1060 = vpack.c.b16 %v1050, %v1050
        %v1061 = vpack.c.b16 %v1051, %v1051
        %v1062 = vpack.c.b16 %v1052, %v1052
        %v1063 = vpack.c.b16 %v1053, %v1053
        %v1064 = vpack.c.b16 %v1054, %v1054
        %v1065 = vpack.c.b16 %v1055, %v1055
        %v1066 = vpack.c.b16 %v1056, %v1056
        %v1067 = vpack.c.b16 %v1057, %v1057
        %v1068 = vpack.c.b16 %v1058, %v1058
        %v1069 = vpack.c.b16 %v1059, %v1059
        %1080 = vst [vmem:[%s305] sm:$0xf] %v1060
        %1081 = vst [vmem:[%s305 + $0x4] sm:$0xf] %v1061
        %1082 = vst [vmem:[%s305 + $0x8] sm:$0xf] %v1062
        %1083 = vst [vmem:[%s305 + $0xc] sm:$0xf] %v1063
        %1084 = vst [vmem:[%s305 + $0x10] sm:$0xf] %v1064
        %1085 = vst [vmem:[%s305 + $0x14] sm:$0xf] %v1065
        %1086 = vst [vmem:[%s305 + $0x18] sm:$0xf] %v1066
        %1087 = vst [vmem:[%s305 + $0x1c] sm:$0xf] %v1067
        %1088 = vst [vmem:[%s305 + $0x20] sm:$0xf] %v1068
        %1089 = vst [vmem:[%s305 + $0x24] sm:$0xf] %v1069
        %1091 = vset.pattern.permute.xlu0 0
        %1092 = vperm.xlu0 %1091, %v351
        %v1093 = vpop.permute.xlu0 %1092
        %1096 = vset.pattern.permute.xlu0 0
        %1097 = vperm.xlu0 %1096, %v352
        %v1098 = vpop.permute.xlu0 %1097
        %1101 = vset.pattern.permute.xlu0 0
        %1102 = vperm.xlu0 %1101, %v353
        %v1103 = vpop.permute.xlu0 %1102
        %1106 = vset.pattern.permute.xlu0 0
        %1107 = vperm.xlu0 %1106, %v354
        %v1108 = vpop.permute.xlu0 %1107
        %1111 = vset.pattern.permute.xlu0 0
        %1112 = vperm.xlu0 %1111, %v355
        %v1113 = vpop.permute.xlu0 %1112
        %1116 = vset.pattern.permute.xlu0 0
        %1117 = vperm.xlu0 %1116, %v356
        %v1118 = vpop.permute.xlu0 %1117
        %1121 = vset.pattern.permute.xlu0 0
        %1122 = vperm.xlu0 %1121, %v357
        %v1123 = vpop.permute.xlu0 %1122
        %1126 = vset.pattern.permute.xlu0 0
        %1127 = vperm.xlu0 %1126, %v358
        %v1128 = vpop.permute.xlu0 %1127
        %1131 = vset.pattern.permute.xlu0 0
        %1132 = vperm.xlu0 %1131, %v359
        %v1133 = vpop.permute.xlu0 %1132
        %1136 = vset.pattern.permute.xlu0 0
        %1137 = vperm.xlu0 %1136, %v360
        %v1138 = vpop.permute.xlu0 %1137
        %v1140 = vmul.f32 %v992, %v1093
        %v1141 = vmul.f32 %v996, %v1098
        %v1142 = vmul.f32 %v1002, %v1103
        %v1143 = vmul.f32 %v1006, %v1108
        %v1144 = vmul.f32 %v1012, %v1113
        %v1145 = vmul.f32 %v1016, %v1118
        %v1146 = vmul.f32 %v1022, %v1123
        %v1147 = vmul.f32 %v1026, %v1128
        %v1148 = vmul.f32 %v1032, %v1133
        %v1149 = vmul.f32 %v1036, %v1138
        %v1150 = vadd.f32 %v1140, %v1141
        %v1151 = vadd.f32 %v1150, %v1142
        %v1152 = vadd.f32 %v1151, %v1143
        %v1153 = vadd.f32 %v1152, %v1144
        %v1154 = vadd.f32 %v1153, %v1145
        %v1155 = vadd.f32 %v1154, %v1146
        %v1156 = vadd.f32 %v1155, %v1147
        %v1157 = vadd.f32 %v1156, %v1148
        %v1158 = vadd.f32 %v1157, %v1149
        %v1159 = vrot.slane %v1158, 4
        %v1160 = vadd.f32 %v1158, %v1159
        %v1161 = vrot.slane %v1160, 2
        %v1162 = vadd.f32 %v1160, %v1161
        %v1163 = vrot.slane %v1162, 1
        %v1164 = vadd.f32 %v1162, %v1163
        %1165 = vst [vmem:[%s311] sm:$0x1] %v1164
        %v1166 = vmul.f32 %v992, %v992
        %v1167 = vmul.f32 %v996, %v996
        %v1168 = vmul.f32 %v1002, %v1002
        %v1169 = vmul.f32 %v1006, %v1006
        %v1170 = vmul.f32 %v1012, %v1012
        %v1171 = vmul.f32 %v1016, %v1016
        %v1172 = vmul.f32 %v1022, %v1022
        %v1173 = vmul.f32 %v1026, %v1026
        %v1174 = vmul.f32 %v1032, %v1032
        %v1175 = vmul.f32 %v1036, %v1036
        %v1176 = vmul.f32 %v1166, %v1093
        %v1177 = vmul.f32 %v1167, %v1098
        %v1178 = vmul.f32 %v1168, %v1103
        %v1179 = vmul.f32 %v1169, %v1108
        %v1180 = vmul.f32 %v1170, %v1113
        %v1181 = vmul.f32 %v1171, %v1118
        %v1182 = vmul.f32 %v1172, %v1123
        %v1183 = vmul.f32 %v1173, %v1128
        %v1184 = vmul.f32 %v1174, %v1133
        %v1185 = vmul.f32 %v1175, %v1138
        %v1186 = vadd.f32 %v1176, %v1177
        %v1187 = vadd.f32 %v1186, %v1178
        %v1188 = vadd.f32 %v1187, %v1179
        %v1189 = vadd.f32 %v1188, %v1180
        %v1190 = vadd.f32 %v1189, %v1181
        %v1191 = vadd.f32 %v1190, %v1182
        %v1192 = vadd.f32 %v1191, %v1183
        %v1193 = vadd.f32 %v1192, %v1184
        %v1194 = vadd.f32 %v1193, %v1185
        %v1195 = vrot.slane %v1194, 4
        %v1196 = vadd.f32 %v1194, %v1195
        %v1197 = vrot.slane %v1196, 2
        %v1198 = vadd.f32 %v1196, %v1197
        %v1199 = vrot.slane %v1198, 1
        %v1200 = vadd.f32 %v1198, %v1199
        %1201 = vst [vmem:[%s317] sm:$0x1] %v1200
        %v1212 = vcombine.high %v994, %v994
        %v1214 = vunpack.c.l.s4 1983009808
        %v1215 = vunpack.c.0.s8 %v1214
        %v1216 = vlaneseq
        %v1217 = vshrl.u32 %v1216, 7
        %v1218 = vsub.s32 %v1215, %v1217
        %v1219 = vrot.slane %v994, %v1218
        %v1221 = vunpack.c.l.s4 1983009808
        %v1222 = vunpack.c.0.s8 %v1221
        %v1223 = vlaneseq
        %v1224 = vshrl.u32 %v1223, 7
        %v1225 = vsub.s32 %v1222, %v1224
        %v1226 = vrot.slane %v1212, %v1225
        %v1227 = vcombine.high %v1219, %v1219
        %v1228 = vcombine.high %v1226, %v1226
        %v1229 = vcombine.high %v998, %v998
        %v1231 = vunpack.c.l.s4 1983009808
        %v1232 = vunpack.c.0.s8 %v1231
        %v1233 = vlaneseq
        %v1234 = vshrl.u32 %v1233, 7
        %v1235 = vsub.s32 %v1232, %v1234
        %v1236 = vrot.slane %v998, %v1235
        %v1238 = vunpack.c.l.s4 1983009808
        %v1239 = vunpack.c.0.s8 %v1238
        %v1240 = vlaneseq
        %v1241 = vshrl.u32 %v1240, 7
        %v1242 = vsub.s32 %v1239, %v1241
        %v1243 = vrot.slane %v1229, %v1242
        %v1244 = vcombine.high %v1236, %v1236
        %v1245 = vcombine.high %v1243, %v1243
        %v1246 = vcombine.high %v1004, %v1004
        %v1248 = vunpack.c.l.s4 1983009808
        %v1249 = vunpack.c.0.s8 %v1248
        %v1250 = vlaneseq
        %v1251 = vshrl.u32 %v1250, 7
        %v1252 = vsub.s32 %v1249, %v1251
        %v1253 = vrot.slane %v1004, %v1252
        %v1255 = vunpack.c.l.s4 1983009808
        %v1256 = vunpack.c.0.s8 %v1255
        %v1257 = vlaneseq
        %v1258 = vshrl.u32 %v1257, 7
        %v1259 = vsub.s32 %v1256, %v1258
        %v1260 = vrot.slane %v1246, %v1259
        %v1261 = vcombine.high %v1253, %v1253
        %v1262 = vcombine.high %v1260, %v1260
        %v1263 = vcombine.high %v1008, %v1008
        %v1265 = vunpack.c.l.s4 1983009808
        %v1266 = vunpack.c.0.s8 %v1265
        %v1267 = vlaneseq
        %v1268 = vshrl.u32 %v1267, 7
        %v1269 = vsub.s32 %v1266, %v1268
        %v1270 = vrot.slane %v1008, %v1269
        %v1272 = vunpack.c.l.s4 1983009808
        %v1273 = vunpack.c.0.s8 %v1272
        %v1274 = vlaneseq
        %v1275 = vshrl.u32 %v1274, 7
        %v1276 = vsub.s32 %v1273, %v1275
        %v1277 = vrot.slane %v1263, %v1276
        %v1278 = vcombine.high %v1270, %v1270
        %v1279 = vcombine.high %v1277, %v1277
        %v1280 = vcombine.high %v1014, %v1014
        %v1282 = vunpack.c.l.s4 1983009808
        %v1283 = vunpack.c.0.s8 %v1282
        %v1284 = vlaneseq
        %v1285 = vshrl.u32 %v1284, 7
        %v1286 = vsub.s32 %v1283, %v1285
        %v1287 = vrot.slane %v1014, %v1286
        %v1289 = vunpack.c.l.s4 1983009808
        %v1290 = vunpack.c.0.s8 %v1289
        %v1291 = vlaneseq
        %v1292 = vshrl.u32 %v1291, 7
        %v1293 = vsub.s32 %v1290, %v1292
        %v1294 = vrot.slane %v1280, %v1293
        %v1295 = vcombine.high %v1287, %v1287
        %v1296 = vcombine.high %v1294, %v1294
        %v1297 = vcombine.high %v1018, %v1018
        %v1299 = vunpack.c.l.s4 1983009808
        %v1300 = vunpack.c.0.s8 %v1299
        %v1301 = vlaneseq
        %v1302 = vshrl.u32 %v1301, 7
        %v1303 = vsub.s32 %v1300, %v1302
        %v1304 = vrot.slane %v1018, %v1303
        %v1306 = vunpack.c.l.s4 1983009808
        %v1307 = vunpack.c.0.s8 %v1306
        %v1308 = vlaneseq
        %v1309 = vshrl.u32 %v1308, 7
        %v1310 = vsub.s32 %v1307, %v1309
        %v1311 = vrot.slane %v1297, %v1310
        %v1312 = vcombine.high %v1304, %v1304
        %v1313 = vcombine.high %v1311, %v1311
        %v1314 = vcombine.high %v1024, %v1024
        %v1316 = vunpack.c.l.s4 1983009808
        %v1317 = vunpack.c.0.s8 %v1316
        %v1318 = vlaneseq
        %v1319 = vshrl.u32 %v1318, 7
        %v1320 = vsub.s32 %v1317, %v1319
        %v1321 = vrot.slane %v1024, %v1320
        %v1323 = vunpack.c.l.s4 1983009808
        %v1324 = vunpack.c.0.s8 %v1323
        %v1325 = vlaneseq
        %v1326 = vshrl.u32 %v1325, 7
        %v1327 = vsub.s32 %v1324, %v1326
        %v1328 = vrot.slane %v1314, %v1327
        %v1329 = vcombine.high %v1321, %v1321
        %v1330 = vcombine.high %v1328, %v1328
        %v1331 = vcombine.high %v1028, %v1028
        %v1333 = vunpack.c.l.s4 1983009808
        %v1334 = vunpack.c.0.s8 %v1333
        %v1335 = vlaneseq
        %v1336 = vshrl.u32 %v1335, 7
        %v1337 = vsub.s32 %v1334, %v1336
        %v1338 = vrot.slane %v1028, %v1337
        %v1340 = vunpack.c.l.s4 1983009808
        %v1341 = vunpack.c.0.s8 %v1340
        %v1342 = vlaneseq
        %v1343 = vshrl.u32 %v1342, 7
        %v1344 = vsub.s32 %v1341, %v1343
        %v1345 = vrot.slane %v1331, %v1344
        %v1346 = vcombine.high %v1338, %v1338
        %v1347 = vcombine.high %v1345, %v1345
        %v1348 = vcombine.high %v1034, %v1034
        %v1350 = vunpack.c.l.s4 1983009808
        %v1351 = vunpack.c.0.s8 %v1350
        %v1352 = vlaneseq
        %v1353 = vshrl.u32 %v1352, 7
        %v1354 = vsub.s32 %v1351, %v1353
        %v1355 = vrot.slane %v1034, %v1354
        %v1357 = vunpack.c.l.s4 1983009808
        %v1358 = vunpack.c.0.s8 %v1357
        %v1359 = vlaneseq
        %v1360 = vshrl.u32 %v1359, 7
        %v1361 = vsub.s32 %v1358, %v1360
        %v1362 = vrot.slane %v1348, %v1361
        %v1363 = vcombine.high %v1355, %v1355
        %v1364 = vcombine.high %v1362, %v1362
        %v1365 = vcombine.high %v1038, %v1038
        %v1367 = vunpack.c.l.s4 1983009808
        %v1368 = vunpack.c.0.s8 %v1367
        %v1369 = vlaneseq
        %v1370 = vshrl.u32 %v1369, 7
        %v1371 = vsub.s32 %v1368, %v1370
        %v1372 = vrot.slane %v1038, %v1371
        %v1374 = vunpack.c.l.s4 1983009808
        %v1375 = vunpack.c.0.s8 %v1374
        %v1376 = vlaneseq
        %v1377 = vshrl.u32 %v1376, 7
        %v1378 = vsub.s32 %v1375, %v1377
        %v1379 = vrot.slane %v1365, %v1378
        %v1380 = vcombine.high %v1372, %v1372
        %v1381 = vcombine.high %v1379, %v1379
        %v1382 = vcombine.low %v1219, %v1227
        %v1383 = vcombine.low %v1226, %v1228
        %v1385 = vunpack.c.l.s4 1983009808
        %v1386 = vunpack.c.0.s8 %v1385
        %v1387 = vlaneseq
        %v1388 = vshrl.u32 %v1387, 7
        %v1389 = vsub.s32 %v1386, %v1388
        %v1390 = vrot.slane %v1382, %v1389
        %v1392 = vunpack.c.l.s4 1983009808
        %v1393 = vunpack.c.0.s8 %v1392
        %v1394 = vlaneseq
        %v1395 = vshrl.u32 %v1394, 7
        %v1396 = vsub.s32 %v1393, %v1395
        %v1397 = vrot.slane %v1383, %v1396
        %v1398 = vcombine.low %v1390, %v1397
        %v1400 = vunpack.c.l.s4 1983009808
        %v1401 = vunpack.c.0.s8 %v1400
        %v1402 = vlaneseq
        %v1403 = vshrl.u32 %v1402, 7
        %v1404 = vsub.s32 %v1401, %v1403
        %v1405 = vrot.slane %v1236, %v1404
        %v1406 = vcombine.low %v1244, %v1243
        %v1407 = vcombine.low %v1245, %v1253
        %v1409 = vunpack.c.l.s4 1983009808
        %v1410 = vunpack.c.0.s8 %v1409
        %v1411 = vlaneseq
        %v1412 = vshrl.u32 %v1411, 7
        %v1413 = vsub.s32 %v1410, %v1412
        %v1414 = vrot.slane %v1406, %v1413
        %v1416 = vunpack.c.l.s4 1983009808
        %v1417 = vunpack.c.0.s8 %v1416
        %v1418 = vlaneseq
        %v1419 = vshrl.u32 %v1418, 7
        %v1420 = vsub.s32 %v1417, %v1419
        %v1421 = vrot.slane %v1407, %v1420
        %v1422 = vcombine.low %v1414, %v1421
        %v1424 = vunpack.c.l.s4 1983009808
        %v1425 = vunpack.c.0.s8 %v1424
        %v1426 = vlaneseq
        %v1427 = vshrl.u32 %v1426, 7
        %v1428 = vsub.s32 %v1425, %v1427
        %v1429 = vrot.slane %v1261, %v1428
        %v1430 = vcombine.low %v1260, %v1262
        %v1431 = vcombine.low %v1270, %v1278
        %v1433 = vunpack.c.l.s4 1983009808
        %v1434 = vunpack.c.0.s8 %v1433
        %v1435 = vlaneseq
        %v1436 = vshrl.u32 %v1435, 7
        %v1437 = vsub.s32 %v1434, %v1436
        %v1438 = vrot.slane %v1430, %v1437
        %v1440 = vunpack.c.l.s4 1983009808
        %v1441 = vunpack.c.0.s8 %v1440
        %v1442 = vlaneseq
        %v1443 = vshrl.u32 %v1442, 7
        %v1444 = vsub.s32 %v1441, %v1443
        %v1445 = vrot.slane %v1431, %v1444
        %v1446 = vcombine.low %v1438, %v1445
        %v1448 = vunpack.c.l.s4 1983009808
        %v1449 = vunpack.c.0.s8 %v1448
        %v1450 = vlaneseq
        %v1451 = vshrl.u32 %v1450, 7
        %v1452 = vsub.s32 %v1449, %v1451
        %v1453 = vrot.slane %v1277, %v1452
        %v1454 = vcombine.low %v1279, %v1287
        %v1455 = vcombine.low %v1295, %v1294
        %v1457 = vunpack.c.l.s4 1983009808
        %v1458 = vunpack.c.0.s8 %v1457
        %v1459 = vlaneseq
        %v1460 = vshrl.u32 %v1459, 7
        %v1461 = vsub.s32 %v1458, %v1460
        %v1462 = vrot.slane %v1454, %v1461
        %v1464 = vunpack.c.l.s4 1983009808
        %v1465 = vunpack.c.0.s8 %v1464
        %v1466 = vlaneseq
        %v1467 = vshrl.u32 %v1466, 7
        %v1468 = vsub.s32 %v1465, %v1467
        %v1469 = vrot.slane %v1455, %v1468
        %v1470 = vcombine.low %v1462, %v1469
        %v1472 = vunpack.c.l.s4 1983009808
        %v1473 = vunpack.c.0.s8 %v1472
        %v1474 = vlaneseq
        %v1475 = vshrl.u32 %v1474, 7
        %v1476 = vsub.s32 %v1473, %v1475
        %v1477 = vrot.slane %v1296, %v1476
        %v1478 = vcombine.low %v1304, %v1312
        %v1479 = vcombine.low %v1311, %v1313
        %v1481 = vunpack.c.l.s4 1983009808
        %v1482 = vunpack.c.0.s8 %v1481
        %v1483 = vlaneseq
        %v1484 = vshrl.u32 %v1483, 7
        %v1485 = vsub.s32 %v1482, %v1484
        %v1486 = vrot.slane %v1478, %v1485
        %v1488 = vunpack.c.l.s4 1983009808
        %v1489 = vunpack.c.0.s8 %v1488
        %v1490 = vlaneseq
        %v1491 = vshrl.u32 %v1490, 7
        %v1492 = vsub.s32 %v1489, %v1491
        %v1493 = vrot.slane %v1479, %v1492
        %v1494 = vcombine.low %v1486, %v1493
        %v1496 = vunpack.c.l.s4 1983009808
        %v1497 = vunpack.c.0.s8 %v1496
        %v1498 = vlaneseq
        %v1499 = vshrl.u32 %v1498, 7
        %v1500 = vsub.s32 %v1497, %v1499
        %v1501 = vrot.slane %v1321, %v1500
        %v1502 = vcombine.low %v1329, %v1328
        %v1503 = vcombine.low %v1330, %v1338
        %v1505 = vunpack.c.l.s4 1983009808
        %v1506 = vunpack.c.0.s8 %v1505
        %v1507 = vlaneseq
        %v1508 = vshrl.u32 %v1507, 7
        %v1509 = vsub.s32 %v1506, %v1508
        %v1510 = vrot.slane %v1502, %v1509
        %v1512 = vunpack.c.l.s4 1983009808
        %v1513 = vunpack.c.0.s8 %v1512
        %v1514 = vlaneseq
        %v1515 = vshrl.u32 %v1514, 7
        %v1516 = vsub.s32 %v1513, %v1515
        %v1517 = vrot.slane %v1503, %v1516
        %v1518 = vcombine.low %v1510, %v1517
        %v1520 = vunpack.c.l.s4 1983009808
        %v1521 = vunpack.c.0.s8 %v1520
        %v1522 = vlaneseq
        %v1523 = vshrl.u32 %v1522, 7
        %v1524 = vsub.s32 %v1521, %v1523
        %v1525 = vrot.slane %v1346, %v1524
        %v1526 = vcombine.low %v1345, %v1347
        %v1527 = vcombine.low %v1355, %v1363
        %v1529 = vunpack.c.l.s4 1983009808
        %v1530 = vunpack.c.0.s8 %v1529
        %v1531 = vlaneseq
        %v1532 = vshrl.u32 %v1531, 7
        %v1533 = vsub.s32 %v1530, %v1532
        %v1534 = vrot.slane %v1526, %v1533
        %v1536 = vunpack.c.l.s4 1983009808
        %v1537 = vunpack.c.0.s8 %v1536
        %v1538 = vlaneseq
        %v1539 = vshrl.u32 %v1538, 7
        %v1540 = vsub.s32 %v1537, %v1539
        %v1541 = vrot.slane %v1527, %v1540
        %v1542 = vcombine.low %v1534, %v1541
        %v1544 = vunpack.c.l.s4 1983009808
        %v1545 = vunpack.c.0.s8 %v1544
        %v1546 = vlaneseq
        %v1547 = vshrl.u32 %v1546, 7
        %v1548 = vsub.s32 %v1545, %v1547
        %v1549 = vrot.slane %v1362, %v1548
        %v1550 = vcombine.low %v1364, %v1372
        %v1551 = vcombine.low %v1380, %v1379
        %v1553 = vunpack.c.l.s4 1983009808
        %v1554 = vunpack.c.0.s8 %v1553
        %v1555 = vlaneseq
        %v1556 = vshrl.u32 %v1555, 7
        %v1557 = vsub.s32 %v1554, %v1556
        %v1558 = vrot.slane %v1550, %v1557
        %v1560 = vunpack.c.l.s4 1983009808
        %v1561 = vunpack.c.0.s8 %v1560
        %v1562 = vlaneseq
        %v1563 = vshrl.u32 %v1562, 7
        %v1564 = vsub.s32 %v1561, %v1563
        %v1565 = vrot.slane %v1551, %v1564
        %v1566 = vcombine.low %v1558, %v1565
        %v1568 = vunpack.c.l.s4 1983009808
        %v1569 = vunpack.c.0.s8 %v1568
        %v1570 = vlaneseq
        %v1571 = vshrl.u32 %v1570, 7
        %v1572 = vsub.s32 %v1569, %v1571
        %v1573 = vrot.slane %v1381, %v1572
        %v1590 = vpack.c.bf16 %v1405, %v1398
        %v1591 = vpack.c.bf16 %v1429, %v1422
        %v1592 = vpack.c.bf16 %v1453, %v1446
        %v1593 = vpack.c.bf16 %v1477, %v1470
        %v1594 = vpack.c.bf16 %v1501, %v1494
        %v1595 = vpack.c.bf16 %v1525, %v1518
        %v1596 = vpack.c.bf16 %v1549, %v1542
        %v1597 = vpack.c.bf16 %v1573, %v1566
        %v1606 = vunpack.c.l.b16 %v1590
        %v1607 = vunpack.c.h.b16 %v1590
        %v1608 = vunpack.c.l.b16 %v1591
        %v1609 = vunpack.c.h.b16 %v1591
        %v1610 = vunpack.c.l.b16 %v1592
        %v1611 = vunpack.c.h.b16 %v1592
        %v1612 = vunpack.c.l.b16 %v1593
        %v1613 = vunpack.c.h.b16 %v1593
        %v1614 = vunpack.c.l.b16 %v1594
        %v1615 = vunpack.c.h.b16 %v1594
        %v1616 = vunpack.c.l.b16 %v1595
        %v1617 = vunpack.c.h.b16 %v1595
        %v1618 = vunpack.c.l.b16 %v1596
        %v1619 = vunpack.c.h.b16 %v1596
        %v1620 = vunpack.c.l.b16 %v1597
        %v1621 = vunpack.c.h.b16 %v1597
        %v1622 = vpack.c.b16 %v1606, %v1606
        %v1623 = vpack.c.b16 %v1607, %v1607
        %v1624 = vpack.c.b16 %v1608, %v1608
        %v1625 = vpack.c.b16 %v1609, %v1609
        %v1626 = vpack.c.b16 %v1610, %v1610
        %v1627 = vpack.c.b16 %v1611, %v1611
        %v1628 = vpack.c.b16 %v1612, %v1612
        %v1629 = vpack.c.b16 %v1613, %v1613
        %v1630 = vpack.c.b16 %v1614, %v1614
        %v1631 = vpack.c.b16 %v1615, %v1615
        %v1632 = vpack.c.b16 %v1616, %v1616
        %v1633 = vpack.c.b16 %v1617, %v1617
        %v1634 = vpack.c.b16 %v1618, %v1618
        %v1635 = vpack.c.b16 %v1619, %v1619
        %v1636 = vpack.c.b16 %v1620, %v1620
        %v1637 = vpack.c.b16 %v1621, %v1621
        %1654 = vst [vmem:[%s348] sm:$0xf] %v1622
        %1655 = vst [vmem:[%s348 + $0x4] sm:$0x1] %v1623
        %1656 = vst [vmem:[%s348 + $0x8] sm:$0xf] %v1624
        %1657 = vst [vmem:[%s348 + $0xc] sm:$0x1] %v1625
        %1658 = vst [vmem:[%s348 + $0x10] sm:$0xf] %v1626
        %1659 = vst [vmem:[%s348 + $0x14] sm:$0x1] %v1627
        %1660 = vst [vmem:[%s348 + $0x18] sm:$0xf] %v1628
        %1661 = vst [vmem:[%s348 + $0x1c] sm:$0x1] %v1629
        %1662 = vst [vmem:[%s348 + $0x20] sm:$0xf] %v1630
        %1663 = vst [vmem:[%s348 + $0x24] sm:$0x1] %v1631
        %1664 = vst [vmem:[%s348 + $0x28] sm:$0xf] %v1632
        %1665 = vst [vmem:[%s348 + $0x2c] sm:$0x1] %v1633
        %1666 = vst [vmem:[%s348 + $0x30] sm:$0xf] %v1634
        %1667 = vst [vmem:[%s348 + $0x34] sm:$0x1] %v1635
        %1668 = vst [vmem:[%s348 + $0x38] sm:$0xf] %v1636
        %1669 = vst [vmem:[%s348 + $0x3c] sm:$0x1] %v1637
        %v1670 = vmul.f32 %v994, %v1093
        %v1671 = vmul.f32 %v998, %v1098
        %v1672 = vmul.f32 %v1004, %v1103
        %v1673 = vmul.f32 %v1008, %v1108
        %v1674 = vmul.f32 %v1014, %v1113
        %v1675 = vmul.f32 %v1018, %v1118
        %v1676 = vmul.f32 %v1024, %v1123
        %v1677 = vmul.f32 %v1028, %v1128
        %v1678 = vmul.f32 %v1034, %v1133
        %v1679 = vmul.f32 %v1038, %v1138
        %v1680 = vadd.f32 %v1670, %v1671
        %v1681 = vadd.f32 %v1680, %v1672
        %v1682 = vadd.f32 %v1681, %v1673
        %v1683 = vadd.f32 %v1682, %v1674
        %v1684 = vadd.f32 %v1683, %v1675
        %v1685 = vadd.f32 %v1684, %v1676
        %v1686 = vadd.f32 %v1685, %v1677
        %v1687 = vadd.f32 %v1686, %v1678
        %v1688 = vadd.f32 %v1687, %v1679
        %v1689 = vrot.slane %v1688, 4
        %v1690 = vadd.f32 %v1688, %v1689
        %v1691 = vrot.slane %v1690, 2
        %v1692 = vadd.f32 %v1690, %v1691
        %v1693 = vrot.slane %v1692, 1
        %v1694 = vadd.f32 %v1692, %v1693
        %1695 = vst [vmem:[%s331] sm:$0x1] %v1694
        %v1696 = vmul.f32 %v994, %v994
        %v1697 = vmul.f32 %v998, %v998
        %v1698 = vmul.f32 %v1004, %v1004
        %v1699 = vmul.f32 %v1008, %v1008
        %v1700 = vmul.f32 %v1014, %v1014
        %v1701 = vmul.f32 %v1018, %v1018
        %v1702 = vmul.f32 %v1024, %v1024
        %v1703 = vmul.f32 %v1028, %v1028
        %v1704 = vmul.f32 %v1034, %v1034
        %v1705 = vmul.f32 %v1038, %v1038
        %v1706 = vmul.f32 %v1696, %v1093
        %v1707 = vmul.f32 %v1697, %v1098
        %v1708 = vmul.f32 %v1698, %v1103
        %v1709 = vmul.f32 %v1699, %v1108
        %v1710 = vmul.f32 %v1700, %v1113
        %v1711 = vmul.f32 %v1701, %v1118
        %v1712 = vmul.f32 %v1702, %v1123
        %v1713 = vmul.f32 %v1703, %v1128
        %v1714 = vmul.f32 %v1704, %v1133
        %v1715 = vmul.f32 %v1705, %v1138
        %v1716 = vadd.f32 %v1706, %v1707
        %v1717 = vadd.f32 %v1716, %v1708
        %v1718 = vadd.f32 %v1717, %v1709
        %v1719 = vadd.f32 %v1718, %v1710
        %v1720 = vadd.f32 %v1719, %v1711
        %v1721 = vadd.f32 %v1720, %v1712
        %v1722 = vadd.f32 %v1721, %v1713
        %v1723 = vadd.f32 %v1722, %v1714
        %v1724 = vadd.f32 %v1723, %v1715
        %v1725 = vrot.slane %v1724, 4
        %v1726 = vadd.f32 %v1724, %v1725
        %v1727 = vrot.slane %v1726, 2
        %v1728 = vadd.f32 %v1726, %v1727
        %v1729 = vrot.slane %v1728, 1
        %v1730 = vadd.f32 %v1728, %v1729
        %1731 = vst [vmem:[%s337] sm:$0x1] %v1730
        %s1732 = sand.u32 %s105, 1
        %s1733 = scalar_lea.sflag [#allocation3], %s1732
        %s1734 = sand.u32 %s105, 1
        %s1735 = smul.addr %s1734, 40
        %s1736 = scalar_lea.vmem [#allocation2], %s1735
        %s1737 = sand.u32 %s29, 1
        %s1738 = scalar_lea.sflag [#allocation5], %s1737
        %s1739 = sand.u32 %s131, 1
        %s1740 = scalar_lea.vmem [#allocation4], %s1739
        %s1741 = sand.u32 %s29, 1
        %s1742 = scalar_lea.sflag [#allocation5], %s1741
        %s1743 = sand.u32 %s157, 1
        %s1744 = scalar_lea.vmem [#allocation6], %s1743
        %s1745 = smul.u32 8, %s29
        %p1746 = scmp.lt.s32.totalorder %s1745, 15
        %s1747 = scalar_select %p1746, %s1745, 15
        %s1748 = smul.addr %s1747, 2
        %s1749 = smul.addr %s1748, 4
        %s1750 = scalar_lea.vmem %s6, %s1749
        %s1751 = sand.u32 %s29, 1
        %s1752 = scalar_lea.sflag [#allocation8], %s1751
        %s1753 = sand.u32 %s209, 1
        %s1754 = scalar_lea.vmem [#allocation7], %s1753
        %s1755 = sand.u32 %s29, 1
        %s1756 = scalar_lea.sflag [#allocation8], %s1755
        %s1757 = sand.u32 %s235, 1
        %s1758 = scalar_lea.vmem [#allocation9], %s1757
        // Predicated region
        $region33: #{tpu_custom_call.1} parent=31 // pred_check
          %p1759 = pneg %p115
        $region34: #{tpu_custom_call.1} parent=31 // pred_check_branch
          %1761 = sbr.rel (%p1759) target = $region36
        $region35: #{tpu_custom_call.1} parent=31 // pred_region
          %s1763 = ssub.s32 640, 640
          %1764 = vsyncadd %s1733, %s1763
          %s1765 = smul.addr %s29, 10
          %s1766 = smul.addr %s1765, 64
          %s1767 = scalar_lea.hbm %s3, %s1766
          %s1768 = sshll.u32 %s1736, 4
          %s1769 = int_to_ptr.vmem [resolvable:$true] %s1768
          %1774 = dma.vmem_to_hbm [thread:$0]  %s1769, 640, %s1767, %s1733, 64, 64, 4
        $region36: #{tpu_custom_call.1} parent=31 // pred_fallthru
          _
        // Predicated region
        $region37: #{tpu_custom_call.1} parent=31 // pred_check
          %p1775 = pneg %p141
        $region38: #{tpu_custom_call.1} parent=31 // pred_check_branch
          %1777 = sbr.rel (%p1775) target = $region40
        $region39: #{tpu_custom_call.1} parent=31 // pred_region
          %s1779 = ssub.s32 16, 16
          %1780 = vsyncadd %s1738, %s1779
          %s1781 = smul.addr %s29, 16
          %s1782 = scalar_lea.hbm %s4, %s1781
          %s1784 = sshll.u32 %s1740, 4
          %s1785 = int_to_ptr.vmem [resolvable:$true] %s1784
          %1787 = dma.vmem_to_hbm [thread:$0]  %s1785, 16, %s1782, %s1738
        $region40: #{tpu_custom_call.1} parent=31 // pred_fallthru
          _
        // Predicated region
        $region41: #{tpu_custom_call.1} parent=31 // pred_check
          %p1788 = pneg %p167
        $region42: #{tpu_custom_call.1} parent=31 // pred_check_branch
          %1790 = sbr.rel (%p1788) target = $region44
        $region43: #{tpu_custom_call.1} parent=31 // pred_region
          %s1792 = ssub.s32 16, 16
          %1793 = vsyncadd %s1742, %s1792
          %s1794 = smul.addr %s29, 16
          %s1795 = scalar_lea.hbm %s5, %s1794
          %s1797 = sshll.u32 %s1744, 4
          %s1798 = int_to_ptr.vmem [resolvable:$true] %s1797
          %1800 = dma.vmem_to_hbm [thread:$0]  %s1798, 16, %s1795, %s1742
        $region44: #{tpu_custom_call.1} parent=31 // pred_fallthru
          _
        // Predicated region
        $region45: #{tpu_custom_call.1} parent=31 // pred_check
          %p1801 = pneg %p193
        $region46: #{tpu_custom_call.1} parent=31 // pred_check_branch
          %1803 = sbr.rel (%p1801) target = $region48
        $region47: #{tpu_custom_call.1} parent=31 // pred_region
          %s1804 = smul.u32 8, %s29
        $region48: #{tpu_custom_call.1} parent=31 // pred_fallthru
          _
        // Predicated region
        $region49: #{tpu_custom_call.1} parent=31 // pred_check
          %p1805 = pneg %p219
        $region50: #{tpu_custom_call.1} parent=31 // pred_check_branch
          %1807 = sbr.rel (%p1805) target = $region52
        $region51: #{tpu_custom_call.1} parent=31 // pred_region
          %s1809 = ssub.s32 16, 16
          %1810 = vsyncadd %s1752, %s1809
          %s1811 = smul.addr %s29, 16
          %s1812 = scalar_lea.hbm %s7, %s1811
          %s1814 = sshll.u32 %s1754, 4
          %s1815 = int_to_ptr.vmem [resolvable:$true] %s1814
          %1817 = dma.vmem_to_hbm [thread:$0]  %s1815, 16, %s1812, %s1752
        $region52: #{tpu_custom_call.1} parent=31 // pred_fallthru
          _
        // Predicated region
        $region53: #{tpu_custom_call.1} parent=31 // pred_check
          %p1818 = pneg %p245
        $region54: #{tpu_custom_call.1} parent=31 // pred_check_branch
          %1820 = sbr.rel (%p1818) target = $region56
        $region55: #{tpu_custom_call.1} parent=31 // pred_region
          %s1822 = ssub.s32 16, 16
          %1823 = vsyncadd %s1756, %s1822
          %s1824 = smul.addr %s29, 16
          %s1825 = scalar_lea.hbm %s8, %s1824
          %s1827 = sshll.u32 %s1758, 4
          %s1828 = int_to_ptr.vmem [resolvable:$true] %s1827
          %1830 = dma.vmem_to_hbm [thread:$0]  %s1828, 16, %s1825, %s1756
        $region56: #{tpu_custom_call.1} parent=31 // pred_fallthru
          _
      $region32: #{tpu_custom_call.1} parent=5 // pred_fallthru
        _
      %p1831 = scmp.le.s32.totalorder 2, %s24
      // Predicated region
      $region57: #{tpu_custom_call.1} parent=5 // pred_check
        %p1832 = pneg %p1831
      $region58: #{tpu_custom_call.1} parent=5 // pred_check_branch
        %1834 = sbr.rel (%p1832) target = $region60
      $region59: #{tpu_custom_call.1} parent=5 // pred_region
        %s1835 = ssub.s32 %s24, 2
        // Predicated region
        $region61: #{tpu_custom_call.1} parent=59 // pred_check
          %p1836 = pneg %p121
        $region62: #{tpu_custom_call.1} parent=59 // pred_check_branch
          %1838 = sbr.rel (%p1836) target = $region64
        $region63: #{tpu_custom_call.1} parent=59 // pred_region
          %s1839 = sand.u32 %s106, 1
          %s1840 = scalar_lea.sflag [#allocation3], %s1839
          %s1841 = sand.u32 %s106, 1
          %s1842 = smul.addr %s1841, 40
          %s1843 = scalar_lea.vmem [#allocation2], %s1842
          %1844 = dma.done %s1840, 640
        $region64: #{tpu_custom_call.1} parent=59 // pred_fallthru
          _
        // Predicated region
        $region65: #{tpu_custom_call.1} parent=59 // pred_check
          %p1845 = pneg %p147
        $region66: #{tpu_custom_call.1} parent=59 // pred_check_branch
          %1847 = sbr.rel (%p1845) target = $region68
        $region67: #{tpu_custom_call.1} parent=59 // pred_region
          %s1848 = sand.u32 %s30, 1
          %s1849 = scalar_lea.sflag [#allocation5], %s1848
          %s1850 = sand.u32 %s132, 1
          %s1851 = scalar_lea.vmem [#allocation4], %s1850
          %1852 = dma.done %s1849, 16
        $region68: #{tpu_custom_call.1} parent=59 // pred_fallthru
          _
        // Predicated region
        $region69: #{tpu_custom_call.1} parent=59 // pred_check
          %p1853 = pneg %p173
        $region70: #{tpu_custom_call.1} parent=59 // pred_check_branch
          %1855 = sbr.rel (%p1853) target = $region72
        $region71: #{tpu_custom_call.1} parent=59 // pred_region
          %s1856 = sand.u32 %s30, 1
          %s1857 = scalar_lea.sflag [#allocation5], %s1856
          %s1858 = sand.u32 %s158, 1
          %s1859 = scalar_lea.vmem [#allocation6], %s1858
          %1860 = dma.done %s1857, 16
        $region72: #{tpu_custom_call.1} parent=59 // pred_fallthru
          _
        // Predicated region
        $region73: #{tpu_custom_call.1} parent=59 // pred_check
          %p1861 = pneg %p199
        $region74: #{tpu_custom_call.1} parent=59 // pred_check_branch
          %1863 = sbr.rel (%p1861) target = $region76
        $region75: #{tpu_custom_call.1} parent=59 // pred_region
          %s1864 = smul.u32 8, %s30
          %p1865 = scmp.lt.s32.totalorder %s1864, 15
          %s1866 = scalar_select %p1865, %s1864, 15
          %s1867 = smul.addr %s1866, 2
          %s1868 = smul.addr %s1867, 4
          %s1869 = scalar_lea.vmem %s6, %s1868
        $region76: #{tpu_custom_call.1} parent=59 // pred_fallthru
          _
        // Predicated region
        $region77: #{tpu_custom_call.1} parent=59 // pred_check
          %p1870 = pneg %p225
        $region78: #{tpu_custom_call.1} parent=59 // pred_check_branch
          %1872 = sbr.rel (%p1870) target = $region80
        $region79: #{tpu_custom_call.1} parent=59 // pred_region
          %s1873 = sand.u32 %s30, 1
          %s1874 = scalar_lea.sflag [#allocation8], %s1873
          %s1875 = sand.u32 %s210, 1
          %s1876 = scalar_lea.vmem [#allocation7], %s1875
          %1877 = dma.done %s1874, 16
        $region80: #{tpu_custom_call.1} parent=59 // pred_fallthru
          _
        // Predicated region
        $region81: #{tpu_custom_call.1} parent=59 // pred_check
          %p1878 = pneg %p251
        $region82: #{tpu_custom_call.1} parent=59 // pred_check_branch
          %1880 = sbr.rel (%p1878) target = $region84
        $region83: #{tpu_custom_call.1} parent=59 // pred_region
          %s1881 = sand.u32 %s30, 1
          %s1882 = scalar_lea.sflag [#allocation8], %s1881
          %s1883 = sand.u32 %s236, 1
          %s1884 = scalar_lea.vmem [#allocation9], %s1883
          %1885 = dma.done %s1882, 16
        $region84: #{tpu_custom_call.1} parent=59 // pred_fallthru
          _
      $region60: #{tpu_custom_call.1} parent=5 // pred_fallthru
        _
    $region6: #{tpu_custom_call.1} parent=1 // loop_footer
      %s28 = sadd.s32 1, %s24
    $region7: #{tpu_custom_call.1} parent=1 // loop_footer_branch
      %23 = sbr.rel target = $region3
    $region8: #{tpu_custom_call.1} parent=1 // loop_exit
      _
    %1886 = vsyncpa [#allocation3], 1
    %s1887 = scalar_lea.sflag [#allocation3], 1
    %1888 = vsyncpa %s1887, 1
    %1889 = vsyncpa [#allocation5], 1
    %s1890 = scalar_lea.sflag [#allocation5], 1
    %1891 = vsyncpa %s1890, 1
    %1892 = vsyncpa [#allocation8], 1
    %s1893 = scalar_lea.sflag [#allocation8], 1
    %1894 = vsyncpa %s1893, 1

</llo_original>
